<compile_context>
chip_gen: v7x
topology: tpu7x:2x2x1
jax: 0.10.0
libtpu: 0.0.40
codegen_flags: <defaults>
</compile_context>

<pallas_src>
import functools

import jax
import jax.numpy as jnp
from jax.experimental import pallas as pl
from jax.experimental.pallas import tpu as pltpu


ACT_DTYPE = jnp.bfloat16  # activation dtype used between layers


# ----------------------------------------------------------------------------- #
# Pallas kernels
# ----------------------------------------------------------------------------- #
def _gemm_bn_kernel(a_ref, w_ref, b_ref, o_ref, acc_ref, *, relu):
    """Fused (im2col-)conv: accumulate A@W in an f32 VMEM scratch over the K grid
    axis; finalize with folded-BN bias (+ReLU) and write a bf16 output block."""
    k = pl.program_id(1)

    @pl.when(k == 0)
    def _():
        acc_ref[...] = jnp.zeros_like(acc_ref)

    acc_ref[...] += jnp.dot(a_ref[...], w_ref[...],
                            preferred_element_type=jnp.float32)

    @pl.when(k == pl.num_programs(1) - 1)
    def _():
        out = acc_ref[...] + b_ref[...]
        if relu:
            out = jnp.maximum(out, 0.0)
        o_ref[...] = out.astype(o_ref.dtype)


def _gemm_bn_res_kernel(a_ref, w_ref, b_ref, r_ref, o_ref, acc_ref, *, relu):
    """Same as above, plus residual add before the (optional) ReLU."""
    k = pl.program_id(1)

    @pl.when(k == 0)
    def _():
        acc_ref[...] = jnp.zeros_like(acc_ref)

    acc_ref[...] += jnp.dot(a_ref[...], w_ref[...],
                            preferred_element_type=jnp.float32)

    @pl.when(k == pl.num_programs(1) - 1)
    def _():
        out = acc_ref[...] + b_ref[...] + r_ref[...].astype(jnp.float32)
        if relu:
            out = jnp.maximum(out, 0.0)
        o_ref[...] = out.astype(o_ref.dtype)


def _maxpool_kernel(x_ref, o_ref):
    # x_ref: [KH*KW, tm, C] stacked window elements -> elementwise max over windows.
    o_ref[...] = jnp.max(x_ref[...], axis=0)


def _avgpool_kernel(x_ref, o_ref):
    # x_ref: [B, H*W, C] bf16 -> global average pool over spatial axis, f32 out.
    o_ref[...] = jnp.mean(x_ref[...].astype(jnp.float32), axis=1)


# ----------------------------------------------------------------------------- #
# Helpers (glue: tiling choice / im2col / padding / reshapes)
# ----------------------------------------------------------------------------- #
def _round_up(x, m):
    return (x + m - 1) // m * m


def _ceil_div(a, b):
    return -(-a // b)


def _k_tiling(k):
    """Pick (tk, kp): K block size (multiple of 128) and padded K (= n_steps*tk).

    Small K -> single K block (no accumulation loop, minimal per-step overhead);
    large K (deep layers) -> biggest blocks (<=1024) that minimize K padding.
    """
    if k <= 1280:
        tk = _round_up(k, 128)
        return tk, tk
    n0 = _ceil_div(k, 1024)
    best_tk, best_kp = None, None
    for n in range(n0, n0 + 3):
        tk = _round_up(_ceil_div(k, n), 128)
        kp = n * tk
        if best_kp is None or kp < best_kp or (kp == best_kp and tk > best_tk):
            best_tk, best_kp = tk, kp
    return best_tk, best_kp


def _m_tiling(m):
    """M block: big blocks for the large early layers, but keep >=2 M blocks when
    possible so the 'parallel' M axis can be sharded across TensorCores."""
    if m >= 1024:
        tm = 512
    elif m >= 256:
        tm = 256
    else:
        tm = _round_up(m, 8)
    return tm, _round_up(m, tm)


def _im2col(x, kh, kw, stride, pad):
    """x: [N, H, W, C] NHWC -> ([N*Ho*Wo, kh*kw*C], (N, Ho, Wo)); column order (kh, kw, c)."""
    n, h, w, c = x.shape
    xp = jnp.pad(x, ((0, 0), (pad, pad), (pad, pad), (0, 0)))
    ho = (h + 2 * pad - kh) // stride + 1
    wo = (w + 2 * pad - kw) // stride + 1
    cols = []
    for i in range(kh):
        for j in range(kw):
            cols.append(xp[:, i:i + stride * ho:stride, j:j + stride * wo:stride, :])
    a = jnp.concatenate(cols, axis=-1).reshape(n * ho * wo, kh * kw * c)
    return a, (n, ho, wo)


def conv_bn_act(x, conv, *, stride, pad, relu=True, residual=None):
    """Conv2d (no bias) + folded BatchNorm + optional residual + optional ReLU.

    x: [N, H, W, Cin] NHWC (bf16).  `conv` carries the pre-padded bf16 GEMM weight
    with the BN scale already folded in (kp, np), the padded BN bias row (1, np)
    and the static tiling metadata.  Output is bf16 NHWC.
    """
    kh, kw, cout = conv["kh"], conv["kw"], conv["cout"]
    k, tk, kp, np_ = conv["k"], conv["tk"], conv["kp"], conv["np"]

    a, (n, ho, wo) = _im2col(x, kh, kw, stride, pad)
    m = a.shape[0]
    tm, mp = _m_tiling(m)

    a_p = jnp.pad(a, ((0, mp - m), (0, kp - k)))

    in_specs = [
        pl.BlockSpec((tm, tk), lambda mm, kk: (mm, kk)),
        pl.BlockSpec((tk, np_), lambda mm, kk: (kk, 0)),
        pl.BlockSpec((1, np_), lambda mm, kk: (0, 0)),
    ]
    args = [a_p, conv["w"], conv["bias"]]

    if residual is not None:
        r_p = jnp.pad(residual.reshape(m, cout), ((0, mp - m), (0, np_ - cout)))
        in_specs.append(pl.BlockSpec((tm, np_), lambda mm, kk: (mm, 0)))
        args.append(r_p)
        kernel = functools.partial(_gemm_bn_res_kernel, relu=relu)
    else:
        kernel = functools.partial(_gemm_bn_kernel, relu=relu)

    bytes_accessed = (mp * kp * 2 + kp * np_ * 2 + np_ * 4 + mp * np_ * 2
                      + (mp * np_ * 2 if residual is not None else 0))
    out = pl.pallas_call(
        kernel,
        out_shape=jax.ShapeDtypeStruct((mp, np_), ACT_DTYPE),
        grid_spec=pltpu.PrefetchScalarGridSpec(
            num_scalar_prefetch=0,
            grid=(mp // tm, kp // tk),           # M parallel (megacore), K arbitrary
            in_specs=in_specs,
            out_specs=pl.BlockSpec((tm, np_), lambda mm, kk: (mm, 0)),
            scratch_shapes=[pltpu.VMEM((tm, np_), jnp.float32)],
        ),
        compiler_params=pltpu.CompilerParams(
            dimension_semantics=("parallel", "arbitrary"),
        ),
        cost_estimate=pl.CostEstimate(
            flops=2 * mp * kp * np_,
            transcendentals=0,
            bytes_accessed=bytes_accessed,
        ),
    )(*args)

    return out[:m, :cout].reshape(n, ho, wo, cout)


def maxpool2d(x, *, k=3, stride=2, pad=1):
    """PyTorch-style MaxPool2d(kernel=3, stride=2, padding=1) on NHWC input, tiled over M."""
    n, h, w, c = x.shape
    xp = jnp.pad(x, ((0, 0), (pad, pad), (pad, pad), (0, 0)),
                 constant_values=-jnp.inf)
    ho = (h + 2 * pad - k) // stride + 1
    wo = (w + 2 * pad - k) // stride + 1
    m = n * ho * wo
    patches = jnp.stack(
        [xp[:, i:i + stride * ho:stride, j:j + stride * wo:stride, :]
         for i in range(k) for j in range(k)],
        axis=0,
    ).reshape(k * k, m, c)

    tm = min(_round_up(m, 8), 1024)
    mp = _round_up(m, tm)
    patches = jnp.pad(patches, ((0, 0), (0, mp - m), (0, 0)))

    out = pl.pallas_call(
        _maxpool_kernel,
        out_shape=jax.ShapeDtypeStruct((mp, c), x.dtype),
        grid_spec=pltpu.PrefetchScalarGridSpec(
            num_scalar_prefetch=0,
            grid=(mp // tm,),
            in_specs=[pl.BlockSpec((k * k, tm, c), lambda i: (0, i, 0))],
            out_specs=pl.BlockSpec((tm, c), lambda i: (i, 0)),
        ),
        compiler_params=pltpu.CompilerParams(dimension_semantics=("parallel",)),
    )(patches)
    return out[:m].reshape(n, ho, wo, c)


def global_avgpool(x):
    """AdaptiveAvgPool2d((1,1)) + flatten on NHWC input -> [N, C] (f32)."""
    n, h, w, c = x.shape
    return pl.pallas_call(
        _avgpool_kernel,
        out_shape=jax.ShapeDtypeStruct((n, c), jnp.float32),
    )(x.reshape(n, h * w, c))


# ----------------------------------------------------------------------------- #
# ResNet-18 backbone (structure of torchvision resnet18) with synthetic weights.
# Conv weights get the BN scale folded in, are reshaped to GEMM layout, padded and
# cast to bf16 ONCE at init time.
# ----------------------------------------------------------------------------- #
def _make_conv(key, kh, kw, cin, cout):
    fan_in = kh * kw * cin
    return jax.random.normal(key, (kh, kw, cin, cout), jnp.float32) * (2.0 / fan_in) ** 0.5


def _make_bn(key, c, eps=1e-5):
    k1, k2, k3, k4 = jax.random.split(key, 4)
    gamma = 1.0 + 0.1 * jax.random.normal(k1, (c,), jnp.float32)
    beta = 0.1 * jax.random.normal(k2, (c,), jnp.float32)
    mean = 0.1 * jax.random.normal(k3, (c,), jnp.float32)
    var = 0.5 + jax.random.uniform(k4, (c,), jnp.float32)
    scale = gamma / jnp.sqrt(var + eps)
    bias = beta - mean * scale
    return scale, bias


def _fold_conv_bn(w_key, bn_key, kh, kw, cin, cout):
    """Conv weight with BN scale folded in + BN bias, pre-packed for the Pallas GEMM."""
    w = _make_conv(w_key, kh, kw, cin, cout)          # HWIO, f32
    scale, bias = _make_bn(bn_key, cout)
    k = kh * kw * cin
    tk, kp = _k_tiling(k)
    np_ = _round_up(cout, 128)
    # y = (A @ W) * scale + bias == A @ (W * scale) + bias  (scale is per-out-channel)
    w_scaled = w.reshape(k, cout) * scale[None, :]
    w2d = jnp.pad(w_scaled, ((0, kp - k), (0, np_ - cout))).astype(jnp.bfloat16)
    b_row = jnp.pad(bias, (0, np_ - cout)).reshape(1, np_).astype(jnp.float32)
    return dict(w=w2d, bias=b_row,
                kh=kh, kw=kw, cin=cin, cout=cout, k=k, tk=tk, kp=kp, np=np_)


def init_resnet18_params(key):
    params = {}
    key, k1, k2 = jax.random.split(key, 3)
    params["conv1"] = _fold_conv_bn(k1, k2, 7, 7, 3, 64)

    cfg = [("layer1", 64, 64, 1), ("layer2", 64, 128, 2),
           ("layer3", 128, 256, 2), ("layer4", 256, 512, 2)]
    for name, cin, cout, stride in cfg:
        blocks = []
        for b in range(2):
            s = stride if b == 0 else 1
            in_c = cin if b == 0 else cout
            blk = {"stride": s}
            key, k1, k2 = jax.random.split(key, 3)
            blk["conv1"] = _fold_conv_bn(k1, k2, 3, 3, in_c, cout)
            key, k1, k2 = jax.random.split(key, 3)
            blk["conv2"] = _fold_conv_bn(k1, k2, 3, 3, cout, cout)
            if s != 1 or in_c != cout:
                key, k1, k2 = jax.random.split(key, 3)
                blk["down"] = _fold_conv_bn(k1, k2, 1, 1, in_c, cout)
            blocks.append(blk)
        params[name] = blocks
    return params


def basic_block(x, blk):
    identity = x
    out = conv_bn_act(x, blk["conv1"], stride=blk["stride"], pad=1, relu=True)
    if "down" in blk:
        identity = conv_bn_act(x, blk["down"], stride=blk["stride"], pad=0, relu=False)
    # second conv: BN, residual add, then ReLU — all fused into the GEMM kernel epilogue.
    out = conv_bn_act(out, blk["conv2"], stride=1, pad=1, relu=True, residual=identity)
    return out


def resnet_backbone_forward(x_nchw, params):
    """Mirrors ResNetBackbone.forward: conv1 -> bn1 -> relu -> maxpool ->
    layer1..4 -> avgpool -> flatten.  Input is NCHW (PyTorch convention)."""
    x = jnp.transpose(x_nchw, (0, 2, 3, 1)).astype(ACT_DTYPE)  # NCHW -> NHWC, bf16
    x = conv_bn_act(x, params["conv1"], stride=2, pad=3, relu=True)
    x = maxpool2d(x, k=3, stride=2, pad=1)
    for layer in ("layer1", "layer2", "layer3", "layer4"):
        for blk in params[layer]:
            x = basic_block(x, blk)
    feat = global_avgpool(x)  # [N, 512]  == x.view(x.size(0), -1) after avgpool
    return feat


# ----------------------------------------------------------------------------- #
if __name__ == "__main__":
    key = jax.random.PRNGKey(0)
    pkey, xkey = jax.random.split(key)

    params = init_resnet18_params(pkey)
    # Small spatial size (64x64) instead of ImageNet 224x224; 3 input channels as
    # required by resnet.conv1.
    x = jax.random.normal(xkey, (2, 3, 64, 64), jnp.float32)  # NCHW

    feat = resnet_backbone_forward(x, params)
    feat = jax.block_until_ready(feat)

    assert feat.shape == (2, 512), feat.shape  # resnet18 feature_dim = 512
    assert jnp.all(jnp.isfinite(feat))
    print("KERNEL_OK")
</pallas_src>

<mosaic_0001>
module attributes {stable_mosaic.version = 11 : i64} {
  func.func @_gemm_bn_kernel(%arg0: i32, %arg1: i32, %arg2: memref<512x256xbf16, #tpu.memory_space<vmem>>, %arg3: memref<256x128xbf16, #tpu.memory_space<vmem>>, %arg4: memref<1x128xf32, #tpu.memory_space<vmem>>, %arg5: memref<512x128xbf16, #tpu.memory_space<vmem>>, %arg6: memref<512x128xf32, #tpu.memory_space<vmem>>) attributes {dimension_semantics = [#tpu.dimension_semantics<parallel>, #tpu.dimension_semantics<arbitrary>], iteration_bounds = array<i64: 4, 1>, scalar_prefetch = 0 : i64, scratch_operands = 1 : i64, tpu.core_type = #tpu.core_type<tc>, window_params = [{transform_indices = @transform_0, window_bounds = array<i64: 512, 256>}, {transform_indices = @transform_1, window_bounds = array<i64: 256, 128>}, {pipeline_mode = #tpu.pipeline_mode<synchronous>, transform_indices = @transform_2, window_bounds = array<i64: 1, 128>}, {transform_indices = @transform_3, window_bounds = array<i64: 512, 128>}]} {
    %c0_i32 = arith.constant 0 : i32
    %0 = arith.cmpi eq, %arg1, %c0_i32 : i32
    %1 = arith.extui %0 : i1 to i32
    %c0_i32_0 = arith.constant 0 : i32
    %2 = arith.cmpi ne, %1, %c0_i32_0 : i32
    scf.if %2 {
      %cst_10 = arith.constant 0.000000e+00 : f32
      %12 = vector.broadcast %cst_10 : f32 to vector<512x128xf32>
      %c0_11 = arith.constant 0 : index
      %c0_12 = arith.constant 0 : index
      %13 = vector.load %arg6[%c0_11, %c0_12] : memref<512x128xf32, #tpu.memory_space<vmem>>, vector<512x128xf32>
      tpu.vector_store %arg6[%c0_11, %c0_12], %12 {strides = array<i32>} : memref<512x128xf32, #tpu.memory_space<vmem>>, vector<512x128xf32>,
    } else {
    }
    %c0 = arith.constant 0 : index
    %c0_1 = arith.constant 0 : index
    %3 = vector.load %arg6[%c0, %c0_1] : memref<512x128xf32, #tpu.memory_space<vmem>>, vector<512x128xf32>
    %c0_2 = arith.constant 0 : index
    %c0_3 = arith.constant 0 : index
    %4 = vector.load %arg2[%c0_2, %c0_3] : memref<512x256xbf16, #tpu.memory_space<vmem>>, vector<512x256xbf16>
    %c0_4 = arith.constant 0 : index
    %c0_5 = arith.constant 0 : index
    %5 = vector.load %arg3[%c0_4, %c0_5] : memref<256x128xbf16, #tpu.memory_space<vmem>>, vector<256x128xbf16>
    %cst = arith.constant dense<0.000000e+00> : vector<512x128xf32>
    %6 = tpu.matmul %4, %5, %cst {dimension_numbers = #tpu.dot_dimension_numbers<[1], [0], [0], [1], [0, 0, 1, 1], [], []>} : vector<512x256xbf16>, vector<256x128xbf16>, vector<512x128xf32> -> vector<512x128xf32>
    %7 = arith.addf %3, %6 : vector<512x128xf32>
    %c0_6 = arith.constant 0 : index
    %c0_7 = arith.constant 0 : index
    %8 = vector.load %arg6[%c0_6, %c0_7] : memref<512x128xf32, #tpu.memory_space<vmem>>, vector<512x128xf32>
    tpu.vector_store %arg6[%c0_6, %c0_7], %7 {strides = array<i32>} : memref<512x128xf32, #tpu.memory_space<vmem>>, vector<512x128xf32>,
    %c0_i32_8 = arith.constant 0 : i32
    %9 = arith.cmpi eq, %arg1, %c0_i32_8 : i32
    %10 = arith.extui %9 : i1 to i32
    %c0_i32_9 = arith.constant 0 : i32
    %11 = arith.cmpi ne, %10, %c0_i32_9 : i32
    scf.if %11 {
      %c0_10 = arith.constant 0 : index
      %c0_11 = arith.constant 0 : index
      %12 = vector.load %arg6[%c0_10, %c0_11] : memref<512x128xf32, #tpu.memory_space<vmem>>, vector<512x128xf32>
      %c0_12 = arith.constant 0 : index
      %c0_13 = arith.constant 0 : index
      %13 = vector.load %arg4[%c0_12, %c0_13] : memref<1x128xf32, #tpu.memory_space<vmem>>, vector<1x128xf32>
      %14 = vector.broadcast %13 : vector<1x128xf32> to vector<512x128xf32>
      %15 = arith.addf %12, %14 : vector<512x128xf32>
      %cst_14 = arith.constant 0.000000e+00 : f32
      %16 = vector.broadcast %cst_14 : f32 to vector<512x128xf32>
      %17 = arith.maximumf %15, %16 : vector<512x128xf32>
      %18 = arith.truncf %17 : vector<512x128xf32> to vector<512x128xbf16>
      %c0_15 = arith.constant 0 : index
      %c0_16 = arith.constant 0 : index
      %19 = vector.load %arg5[%c0_15, %c0_16] : memref<512x128xbf16, #tpu.memory_space<vmem>>, vector<512x128xbf16>
      tpu.vector_store %arg5[%c0_15, %c0_16], %18 {strides = array<i32>} : memref<512x128xbf16, #tpu.memory_space<vmem>>, vector<512x128xbf16>,
    } else {
    }
    return
  }
  func.func @transform_0(%arg0: i32, %arg1: i32) -> (i32, i32) {
    %c0_i32 = arith.constant 0 : i32
    return %arg0, %arg1 : i32, i32
  }
  func.func @transform_1(%arg0: i32, %arg1: i32) -> (i32, i32) {
    %c0_i32 = arith.constant 0 : i32
    %c0_i32_0 = arith.constant 0 : i32
    return %arg1, %c0_i32 : i32, i32
  }
  func.func @transform_2(%arg0: i32, %arg1: i32) -> (i32, i32) {
    %c0_i32 = arith.constant 0 : i32
    %c0_i32_0 = arith.constant 0 : i32
    %c0_i32_1 = arith.constant 0 : i32
    return %c0_i32, %c0_i32_0 : i32, i32
  }
  func.func @transform_3(%arg0: i32, %arg1: i32) -> (i32, i32) {
    %c0_i32 = arith.constant 0 : i32
    %c0_i32_0 = arith.constant 0 : i32
    return %arg0, %c0_i32 : i32, i32
  }
}

</mosaic_0001>

<llo_original>
// kernel: tpu_custom_call.1
$region0: #{tpu_custom_call.1}
  #allocation0 [shape = 'u32[]', space=smem, size = 0x4, offset = 0x4, fixed_abs, tag = 'smem constant byte address 0x4 - core index']
  #allocation1 [shape = 'u32[144,128]{1,0:T(1,128)}', space=vmem, size = 0x12000, scoped, tag = 'internal scratch']
  #allocation2 [shape = 'f32[512,128]{1,0:T(8,128)}', space=vmem, size = 0x40000, scoped, tag = 'scratch operand']
  %s0 = inlined_call_operand.hbm [shape: bf16[2048,256], index: 0, kind: input, shape index: {}]
  %s1 = inlined_call_operand.hbm [shape: bf16[256,128], index: 1, kind: input, shape index: {}]
  %s2 = inlined_call_operand.vmem [shape: f32[1,128], index: 2, kind: input, shape index: {}]
  %s3 = inlined_call_operand.hbm [shape: bf16[2048,128], index: 3, kind: output, shape index: {}]
  %s4 = sld [smem:[#allocation0]]
  $region61: #{tpu_custom_call.1} parent=0
    _
  %s6 = ssub.s32 1, %s4
  %s7 = scalar_select 0, %s6, %s4
  $region1: #{tpu_custom_call.1} parent=0
    #allocation3 [shape = 'u8[524288]{0}', space=vmem, size = 0x80000, scoped, tag = 'input window, operand 0']
    #allocation4 [shape = 's32[2]{0}', space=sflag, size = 0x8, scoped, tag = 'scoped memory for tpu_custom_call.1']
    #allocation5 [shape = 's32[2]{0}', space=sflag, size = 0x8, scoped, tag = 'scoped memory for tpu_custom_call.1']
    #allocation6 [shape = 'u8[65536]{0}', space=vmem, size = 0x10000, scoped, tag = 'input window, operand 1, single buffered']
    #allocation7 [shape = 's32[1]{0}', space=sflag, size = 0x4, scoped, tag = 'scoped memory for tpu_custom_call.1']
    #allocation8 [shape = 'u8[262144]{0}', space=vmem, size = 0x40000, scoped, tag = 'output window, operand 0']
    %8 = vsyncpa [#allocation4], 0
    %s9 = scalar_lea.sflag [#allocation4], 1
    %10 = vsyncpa %s9, 0
    %11 = vsyncpa [#allocation7], 0
    %12 = vsyncpa [#allocation5], 0
    %s13 = scalar_lea.sflag [#allocation5], 1
    %14 = vsyncpa %s13, 0
    loop: start=0, step=1, limit=6
    $region2: #{tpu_custom_call.1} parent=1 // loop_pre_header
      _
    $region3: #{tpu_custom_call.1} parent=1 // loop_header
      %s16 = sphi 0, %s20
      %p17 = scmp.ge.s32.totalorder %s16, 6
      %s23 = sphi 0, %s35
      %s24 = sphi 0, %s31
      %s25 = sphi 0, %s23
      %s26 = sphi 0, %s24
      %s27 = sphi 0, %s25
      %s28 = sphi 0, %s26
      %s40 = sphi 0, %s42
      %s43 = sphi 0, %s40
      %s44 = sphi 0, %s43
      %s60 = sphi 0, %s44
      %s66 = sphi 0, %s68
      %s69 = sphi 0, %s66
      %s70 = sphi 0, %s69
      %s86 = sphi 0, %s70
      %s90 = sphi 0, %s90
      %s92 = sphi 0, %s90
      %s93 = sphi 0, %s92
      %s107 = sphi 0, %s93
      %s113 = sphi 0, %s115
      %s116 = sphi 0, %s113
      %s117 = sphi 0, %s116
      %s133 = sphi 0, %s117
    $region4: #{tpu_custom_call.1} parent=1 // loop_header_branch
      %19 = sbr.rel (%p17) target = $region8
    $region5: #{tpu_custom_call.1} parent=1 // loop_body
      %s21 = ssub.s32 %s16, 1
      %s22 = ssub.s32 %s16, 2
      %s29 = sadd.s32 1, %s24
      %p30 = scmp.ge.s32.totalorder %s29, 1
      %s31 = scalar_select %p30, 0, %s29
      %s32 = sadd.s32 1, %s23
      %s33 = scalar_select %p30, %s32, %s23
      %p34 = scmp.ge.s32.totalorder %s33, 4
      %s35 = scalar_select %p34, 0, %s33
      %s36 = ssub.s32 %s23, %s35
      %s37 = ssub.s32 %s24, %s31
      %s38 = sor.u32 %s36, %s37
      %p39 = scmp.eq.s32.totalorder %s38, 0
      %s41 = sadd.s32 %s40, 1
      %s42 = scalar_select %p39, %s40, %s41
      %p45 = pneg %p39
      %p46 = scmp.eq.s32.totalorder %s16, 3
      %p47 = por %p45, %p46
      %p48 = scmp.ne.s32.totalorder %s40, %s43
      %p49 = scmp.eq.s32.totalorder %s16, 0
      %p50 = por %p48, %p49
      %p51 = scmp.ne.s32.totalorder %s40, %s43
      %p52 = scmp.eq.s32.totalorder %s21, 3
      %p53 = por %p51, %p52
      %p54 = scmp.ne.s32.totalorder %s43, %s44
      %p55 = scmp.eq.s32.totalorder %s21, 0
      %p56 = por %p54, %p55
      %p57 = scmp.ne.s32.totalorder %s43, %s44
      %p58 = scmp.eq.s32.totalorder %s22, 3
      %p59 = por %p57, %p58
      %p61 = scmp.ne.s32.totalorder %s44, %s60
      %p62 = scmp.eq.s32.totalorder %s22, 0
      %p63 = por %p61, %p62
      %s64 = ssub.s32 %s24, %s31
      %p65 = scmp.eq.s32.totalorder %s64, 0
      %s67 = sadd.s32 %s66, 1
      %s68 = scalar_select %p65, %s66, %s67
      %p71 = pneg %p65
      %p72 = scmp.eq.s32.totalorder %s16, 3
      %p73 = por %p71, %p72
      %p74 = scmp.ne.s32.totalorder %s66, %s69
      %p75 = scmp.eq.s32.totalorder %s16, 0
      %p76 = por %p74, %p75
      %p77 = scmp.ne.s32.totalorder %s66, %s69
      %p78 = scmp.eq.s32.totalorder %s21, 3
      %p79 = por %p77, %p78
      %p80 = scmp.ne.s32.totalorder %s69, %s70
      %p81 = scmp.eq.s32.totalorder %s21, 0
      %p82 = por %p80, %p81
      %p83 = scmp.ne.s32.totalorder %s69, %s70
      %p84 = scmp.eq.s32.totalorder %s22, 3
      %p85 = por %p83, %p84
      %p87 = scmp.ne.s32.totalorder %s70, %s86
      %p88 = scmp.eq.s32.totalorder %s22, 0
      %p89 = por %p87, %p88
      %s91 = sadd.s32 %s90, 1
      %p94 = scmp.eq.s32.totalorder %s16, 3
      %p95 = scmp.ne.s32.totalorder %s90, %s92
      %p96 = scmp.eq.s32.totalorder %s16, 0
      %p97 = por %p95, %p96
      %p98 = scmp.ne.s32.totalorder %s90, %s92
      %p99 = scmp.eq.s32.totalorder %s21, 3
      %p100 = por %p98, %p99
      %p101 = scmp.ne.s32.totalorder %s92, %s93
      %p102 = scmp.eq.s32.totalorder %s21, 0
      %p103 = por %p101, %p102
      %p104 = scmp.ne.s32.totalorder %s92, %s93
      %p105 = scmp.eq.s32.totalorder %s22, 3
      %p106 = por %p104, %p105
      %p108 = scmp.ne.s32.totalorder %s93, %s107
      %p109 = scmp.eq.s32.totalorder %s22, 0
      %p110 = por %p108, %p109
      %s111 = ssub.s32 %s23, %s35
      %p112 = scmp.eq.s32.totalorder %s111, 0
      %s114 = sadd.s32 %s113, 1
      %s115 = scalar_select %p112, %s113, %s114
      %p118 = pneg %p112
      %p119 = scmp.eq.s32.totalorder %s16, 3
      %p120 = por %p118, %p119
      %p121 = scmp.ne.s32.totalorder %s113, %s116
      %p122 = scmp.eq.s32.totalorder %s16, 0
      %p123 = por %p121, %p122
      %p124 = scmp.ne.s32.totalorder %s113, %s116
      %p125 = scmp.eq.s32.totalorder %s21, 3
      %p126 = por %p124, %p125
      %p127 = scmp.ne.s32.totalorder %s116, %s117
      %p128 = scmp.eq.s32.totalorder %s21, 0
      %p129 = por %p127, %p128
      %p130 = scmp.ne.s32.totalorder %s116, %s117
      %p131 = scmp.eq.s32.totalorder %s22, 3
      %p132 = por %p130, %p131
      %p134 = scmp.ne.s32.totalorder %s117, %s133
      %p135 = scmp.eq.s32.totalorder %s22, 0
      %p136 = por %p134, %p135
      %p137 = scmp.le.s32.totalorder 1, %s16
      %p138 = scmp.lt.s32.totalorder %s16, 5
      %p139 = pnand %p137, %p138
      %p140 = pneg %p139
      // Predicated region
      $region9: #{tpu_custom_call.1} parent=5 // pred_check
        _
      $region10: #{tpu_custom_call.1} parent=5 // pred_check_branch
        %142 = sbr.rel (%p139) target = $region12
      $region11: #{tpu_custom_call.1} parent=5 // pred_region
        %s143 = ssub.s32 %s16, 1
        // Predicated region
        $region13: #{tpu_custom_call.1} parent=11 // pred_check
          %p144 = pneg %p82
        $region14: #{tpu_custom_call.1} parent=11 // pred_check_branch
          %146 = sbr.rel (%p144) target = $region16
        $region15: #{tpu_custom_call.1} parent=11 // pred_region
          %s147 = smul.u32 32, %s26
          %s149 = ssub.s32 2048, 2048
          %150 = vsyncadd [#allocation7], %s149
          %s151 = smul.addr %s147, 64
          %s152 = scalar_lea.hbm %s1, %s151
          %s153 = sshll.u32 [#allocation6], 4
          %s154 = int_to_ptr.vmem [resolvable:$true] %s153
          %159 = dma.hbm_to_vmem [thread:$0]  %s152, 2048, %s154, [#allocation7], 64, 64, 4
        $region16: #{tpu_custom_call.1} parent=11 // pred_fallthru
          _
        // Predicated region
        $region17: #{tpu_custom_call.1} parent=11 // pred_check
          %p160 = pneg %p103
        $region18: #{tpu_custom_call.1} parent=11 // pred_check_branch
          %162 = sbr.rel (%p160) target = $region20
        $region19: #{tpu_custom_call.1} parent=11 // pred_region
          _
        $region20: #{tpu_custom_call.1} parent=11 // pred_fallthru
          _
      $region12: #{tpu_custom_call.1} parent=5 // pred_fallthru
        _
      %p163 = scmp.lt.s32.totalorder %s16, 4
      // Predicated region
      $region21: #{tpu_custom_call.1} parent=5 // pred_check
        %p164 = pneg %p163
      $region22: #{tpu_custom_call.1} parent=5 // pred_check_branch
        %166 = sbr.rel (%p164) target = $region24
      $region23: #{tpu_custom_call.1} parent=5 // pred_region
        // Predicated region
        $region25: #{tpu_custom_call.1} parent=23 // pred_check
          %p167 = pneg %p50
        $region26: #{tpu_custom_call.1} parent=23 // pred_check_branch
          %169 = sbr.rel (%p167) target = $region28
        $region27: #{tpu_custom_call.1} parent=23 // pred_region
          %s170 = sand.u32 %s40, 1
          %s171 = scalar_lea.sflag [#allocation4], %s170
          %s172 = sand.u32 %s40, 1
          %s173 = smul.addr %s172, 512
          %s174 = scalar_lea.vmem [#allocation3], %s173
          %s175 = smul.u32 64, %s23
          %s176 = smul.u32 2, %s24
          %s178 = ssub.s32 8192, 8192
          %179 = vsyncadd %s171, %s178
          %s180 = smul.addr %s175, 2
          %s181 = sadd.s32 %s176, %s180
          %s182 = smul.addr %s181, 64
          %s183 = scalar_lea.hbm %s0, %s182
          %s184 = sshll.u32 %s174, 4
          %s185 = int_to_ptr.vmem [resolvable:$true] %s184
          %190 = dma.hbm_to_vmem [thread:$0]  %s183, 8192, %s185, %s171, 128, 128, 8
        $region28: #{tpu_custom_call.1} parent=23 // pred_fallthru
          _
      $region24: #{tpu_custom_call.1} parent=5 // pred_fallthru
        _
      %p191 = scmp.le.s32.totalorder 1, %s16
      %p192 = scmp.lt.s32.totalorder %s16, 5
      %p193 = pnand %p191, %p192
      %p194 = pneg %p193
      // Predicated region
      $region29: #{tpu_custom_call.1} parent=5 // pred_check
        _
      $region30: #{tpu_custom_call.1} parent=5 // pred_check_branch
        %196 = sbr.rel (%p193) target = $region32
      $region31: #{tpu_custom_call.1} parent=5 // pred_region
        %s197 = ssub.s32 %s16, 1
        %s198 = sand.u32 %s43, 1
        %s199 = scalar_lea.sflag [#allocation4], %s198
        %s200 = sand.u32 %s43, 1
        %s201 = smul.addr %s200, 512
        %s202 = scalar_lea.vmem [#allocation3], %s201
        // Predicated region
        $region33: #{tpu_custom_call.1} parent=31 // pred_check
          %p203 = pneg %p56
        $region34: #{tpu_custom_call.1} parent=31 // pred_check_branch
          %205 = sbr.rel (%p203) target = $region36
        $region35: #{tpu_custom_call.1} parent=31 // pred_region
          %206 = dma.done %s199, 8192
        $region36: #{tpu_custom_call.1} parent=31 // pred_fallthru
          _
        // Predicated region
        $region37: #{tpu_custom_call.1} parent=31 // pred_check
          %p207 = pneg %p82
        $region38: #{tpu_custom_call.1} parent=31 // pred_check_branch
          %209 = sbr.rel (%p207) target = $region40
        $region39: #{tpu_custom_call.1} parent=31 // pred_region
          %210 = dma.done [#allocation7], 2048
        $region40: #{tpu_custom_call.1} parent=31 // pred_fallthru
          _
        %s211 = sand.u32 %s43, 1
        %s212 = scalar_lea.sflag [#allocation4], %s211
        %s213 = sand.u32 %s43, 1
        %s214 = smul.addr %s213, 512
        %s215 = scalar_lea.vmem [#allocation3], %s214
        %p216 = pneg %p56
        %p217 = pneg %p53
        %p218 = pneg %p82
        %p219 = pneg %p79
        %p220 = pneg %p103
        %p221 = pneg %p100
        %p222 = pneg %p129
        %p223 = pneg %p126
        %s224 = sand.u32 %s116, 1
        %s225 = scalar_lea.sflag [#allocation5], %s224
        %s226 = sand.u32 %s116, 1
        %s227 = smul.addr %s226, 256
        %s228 = scalar_lea.vmem [#allocation8], %s227
        %s229 = smul.u32 64, %s25
        %s230 = smul.u32 2, %s26
        %s231 = smul.u32 32, %s26
        %s232 = smul.u32 64, %s25
        %p234 = scmp.eq.s32.totalorder %s26, 0
        // Predicated region
        $region41: #{tpu_custom_call.1} parent=31 // pred_check
          %p235 = pneg %p234
        $region42: #{tpu_custom_call.1} parent=31 // pred_check_branch
          %237 = sbr.rel (%p235) target = $region44
        $region43: #{tpu_custom_call.1} parent=31 // pred_region
          %238 = vst [vmem:[#allocation2] sm:$0xff] 0.0
          %239 = vst [vmem:[#allocation2 + $0x8] sm:$0xff] 0.0
          %240 = vst [vmem:[#allocation2 + $0x10] sm:$0xff] 0.0
          %241 = vst [vmem:[#allocation2 + $0x18] sm:$0xff] 0.0
          %242 = vst [vmem:[#allocation2 + $0x20] sm:$0xff] 0.0
          %243 = vst [vmem:[#allocation2 + $0x28] sm:$0xff] 0.0
          %244 = vst [vmem:[#allocation2 + $0x30] sm:$0xff] 0.0
          %245 = vst [vmem:[#allocation2 + $0x38] sm:$0xff] 0.0
          %246 = vst [vmem:[#allocation2 + $0x40] sm:$0xff] 0.0
          %247 = vst [vmem:[#allocation2 + $0x48] sm:$0xff] 0.0
          %248 = vst [vmem:[#allocation2 + $0x50] sm:$0xff] 0.0
          %249 = vst [vmem:[#allocation2 + $0x58] sm:$0xff] 0.0
          %250 = vst [vmem:[#allocation2 + $0x60] sm:$0xff] 0.0
          %251 = vst [vmem:[#allocation2 + $0x68] sm:$0xff] 0.0
          %252 = vst [vmem:[#allocation2 + $0x70] sm:$0xff] 0.0
          %253 = vst [vmem:[#allocation2 + $0x78] sm:$0xff] 0.0
          %254 = vst [vmem:[#allocation2 + $0x80] sm:$0xff] 0.0
          %255 = vst [vmem:[#allocation2 + $0x88] sm:$0xff] 0.0
          %256 = vst [vmem:[#allocation2 + $0x90] sm:$0xff] 0.0
          %257 = vst [vmem:[#allocation2 + $0x98] sm:$0xff] 0.0
          %258 = vst [vmem:[#allocation2 + $0xa0] sm:$0xff] 0.0
          %259 = vst [vmem:[#allocation2 + $0xa8] sm:$0xff] 0.0
          %260 = vst [vmem:[#allocation2 + $0xb0] sm:$0xff] 0.0
          %261 = vst [vmem:[#allocation2 + $0xb8] sm:$0xff] 0.0
          %262 = vst [vmem:[#allocation2 + $0xc0] sm:$0xff] 0.0
          %263 = vst [vmem:[#allocation2 + $0xc8] sm:$0xff] 0.0
          %264 = vst [vmem:[#allocation2 + $0xd0] sm:$0xff] 0.0
          %265 = vst [vmem:[#allocation2 + $0xd8] sm:$0xff] 0.0
          %266 = vst [vmem:[#allocation2 + $0xe0] sm:$0xff] 0.0
          %267 = vst [vmem:[#allocation2 + $0xe8] sm:$0xff] 0.0
          %268 = vst [vmem:[#allocation2 + $0xf0] sm:$0xff] 0.0
          %269 = vst [vmem:[#allocation2 + $0xf8] sm:$0xff] 0.0
          %270 = vst [vmem:[#allocation2 + $0x100] sm:$0xff] 0.0
          %271 = vst [vmem:[#allocation2 + $0x108] sm:$0xff] 0.0
          %272 = vst [vmem:[#allocation2 + $0x110] sm:$0xff] 0.0
          %273 = vst [vmem:[#allocation2 + $0x118] sm:$0xff] 0.0
          %274 = vst [vmem:[#allocation2 + $0x120] sm:$0xff] 0.0
          %275 = vst [vmem:[#allocation2 + $0x128] sm:$0xff] 0.0
          %276 = vst [vmem:[#allocation2 + $0x130] sm:$0xff] 0.0
          %277 = vst [vmem:[#allocation2 + $0x138] sm:$0xff] 0.0
          %278 = vst [vmem:[#allocation2 + $0x140] sm:$0xff] 0.0
          %279 = vst [vmem:[#allocation2 + $0x148] sm:$0xff] 0.0
          %280 = vst [vmem:[#allocation2 + $0x150] sm:$0xff] 0.0
          %281 = vst [vmem:[#allocation2 + $0x158] sm:$0xff] 0.0
          %282 = vst [vmem:[#allocation2 + $0x160] sm:$0xff] 0.0
          %283 = vst [vmem:[#allocation2 + $0x168] sm:$0xff] 0.0
          %284 = vst [vmem:[#allocation2 + $0x170] sm:$0xff] 0.0
          %285 = vst [vmem:[#allocation2 + $0x178] sm:$0xff] 0.0
          %286 = vst [vmem:[#allocation2 + $0x180] sm:$0xff] 0.0
          %287 = vst [vmem:[#allocation2 + $0x188] sm:$0xff] 0.0
          %288 = vst [vmem:[#allocation2 + $0x190] sm:$0xff] 0.0
          %289 = vst [vmem:[#allocation2 + $0x198] sm:$0xff] 0.0
          %290 = vst [vmem:[#allocation2 + $0x1a0] sm:$0xff] 0.0
          %291 = vst [vmem:[#allocation2 + $0x1a8] sm:$0xff] 0.0
          %292 = vst [vmem:[#allocation2 + $0x1b0] sm:$0xff] 0.0
          %293 = vst [vmem:[#allocation2 + $0x1b8] sm:$0xff] 0.0
          %294 = vst [vmem:[#allocation2 + $0x1c0] sm:$0xff] 0.0
          %295 = vst [vmem:[#allocation2 + $0x1c8] sm:$0xff] 0.0
          %296 = vst [vmem:[#allocation2 + $0x1d0] sm:$0xff] 0.0
          %297 = vst [vmem:[#allocation2 + $0x1d8] sm:$0xff] 0.0
          %298 = vst [vmem:[#allocation2 + $0x1e0] sm:$0xff] 0.0
          %299 = vst [vmem:[#allocation2 + $0x1e8] sm:$0xff] 0.0
          %300 = vst [vmem:[#allocation2 + $0x1f0] sm:$0xff] 0.0
          %301 = vst [vmem:[#allocation2 + $0x1f8] sm:$0xff] 0.0
        $region44: #{tpu_custom_call.1} parent=31 // pred_fallthru
          _
        %v302 = vld [vmem:[#allocation2] sm:$0xff]
        %v303 = vld [vmem:[#allocation2 + $0x8] sm:$0xff]
        %v304 = vld [vmem:[#allocation2 + $0x10] sm:$0xff]
        %v305 = vld [vmem:[#allocation2 + $0x18] sm:$0xff]
        %v306 = vld [vmem:[#allocation2 + $0x20] sm:$0xff]
        %v307 = vld [vmem:[#allocation2 + $0x28] sm:$0xff]
        %v308 = vld [vmem:[#allocation2 + $0x30] sm:$0xff]
        %v309 = vld [vmem:[#allocation2 + $0x38] sm:$0xff]
        %v310 = vld [vmem:[#allocation2 + $0x40] sm:$0xff]
        %v311 = vld [vmem:[#allocation2 + $0x48] sm:$0xff]
        %v312 = vld [vmem:[#allocation2 + $0x50] sm:$0xff]
        %v313 = vld [vmem:[#allocation2 + $0x58] sm:$0xff]
        %v314 = vld [vmem:[#allocation2 + $0x60] sm:$0xff]
        %v315 = vld [vmem:[#allocation2 + $0x68] sm:$0xff]
        %v316 = vld [vmem:[#allocation2 + $0x70] sm:$0xff]
        %v317 = vld [vmem:[#allocation2 + $0x78] sm:$0xff]
        %v318 = vld [vmem:[#allocation2 + $0x80] sm:$0xff]
        %v319 = vld [vmem:[#allocation2 + $0x88] sm:$0xff]
        %v320 = vld [vmem:[#allocation2 + $0x90] sm:$0xff]
        %v321 = vld [vmem:[#allocation2 + $0x98] sm:$0xff]
        %v322 = vld [vmem:[#allocation2 + $0xa0] sm:$0xff]
        %v323 = vld [vmem:[#allocation2 + $0xa8] sm:$0xff]
        %v324 = vld [vmem:[#allocation2 + $0xb0] sm:$0xff]
        %v325 = vld [vmem:[#allocation2 + $0xb8] sm:$0xff]
        %v326 = vld [vmem:[#allocation2 + $0xc0] sm:$0xff]
        %v327 = vld [vmem:[#allocation2 + $0xc8] sm:$0xff]
        %v328 = vld [vmem:[#allocation2 + $0xd0] sm:$0xff]
        %v329 = vld [vmem:[#allocation2 + $0xd8] sm:$0xff]
        %v330 = vld [vmem:[#allocation2 + $0xe0] sm:$0xff]
        %v331 = vld [vmem:[#allocation2 + $0xe8] sm:$0xff]
        %v332 = vld [vmem:[#allocation2 + $0xf0] sm:$0xff]
        %v333 = vld [vmem:[#allocation2 + $0xf8] sm:$0xff]
        %v334 = vld [vmem:[#allocation2 + $0x100] sm:$0xff]
        %v335 = vld [vmem:[#allocation2 + $0x108] sm:$0xff]
        %v336 = vld [vmem:[#allocation2 + $0x110] sm:$0xff]
        %v337 = vld [vmem:[#allocation2 + $0x118] sm:$0xff]
        %v338 = vld [vmem:[#allocation2 + $0x120] sm:$0xff]
        %v339 = vld [vmem:[#allocation2 + $0x128] sm:$0xff]
        %v340 = vld [vmem:[#allocation2 + $0x130] sm:$0xff]
        %v341 = vld [vmem:[#allocation2 + $0x138] sm:$0xff]
        %v342 = vld [vmem:[#allocation2 + $0x140] sm:$0xff]
        %v343 = vld [vmem:[#allocation2 + $0x148] sm:$0xff]
        %v344 = vld [vmem:[#allocation2 + $0x150] sm:$0xff]
        %v345 = vld [vmem:[#allocation2 + $0x158] sm:$0xff]
        %v346 = vld [vmem:[#allocation2 + $0x160] sm:$0xff]
        %v347 = vld [vmem:[#allocation2 + $0x168] sm:$0xff]
        %v348 = vld [vmem:[#allocation2 + $0x170] sm:$0xff]
        %v349 = vld [vmem:[#allocation2 + $0x178] sm:$0xff]
        %v350 = vld [vmem:[#allocation2 + $0x180] sm:$0xff]
        %v351 = vld [vmem:[#allocation2 + $0x188] sm:$0xff]
        %v352 = vld [vmem:[#allocation2 + $0x190] sm:$0xff]
        %v353 = vld [vmem:[#allocation2 + $0x198] sm:$0xff]
        %v354 = vld [vmem:[#allocation2 + $0x1a0] sm:$0xff]
        %v355 = vld [vmem:[#allocation2 + $0x1a8] sm:$0xff]
        %v356 = vld [vmem:[#allocation2 + $0x1b0] sm:$0xff]
        %v357 = vld [vmem:[#allocation2 + $0x1b8] sm:$0xff]
        %v358 = vld [vmem:[#allocation2 + $0x1c0] sm:$0xff]
        %v359 = vld [vmem:[#allocation2 + $0x1c8] sm:$0xff]
        %v360 = vld [vmem:[#allocation2 + $0x1d0] sm:$0xff]
        %v361 = vld [vmem:[#allocation2 + $0x1d8] sm:$0xff]
        %v362 = vld [vmem:[#allocation2 + $0x1e0] sm:$0xff]
        %v363 = vld [vmem:[#allocation2 + $0x1e8] sm:$0xff]
        %v364 = vld [vmem:[#allocation2 + $0x1f0] sm:$0xff]
        %v365 = vld [vmem:[#allocation2 + $0x1f8] sm:$0xff]
        %v366 = vld [vmem:[%s202] sm:$0xff]
        %v367 = vld [vmem:[%s202 + $0x8] sm:$0xff]
        %v368 = vld [vmem:[%s202 + $0x10] sm:$0xff]
        %v369 = vld [vmem:[%s202 + $0x18] sm:$0xff]
        %v370 = vld [vmem:[%s202 + $0x20] sm:$0xff]
        %v371 = vld [vmem:[%s202 + $0x28] sm:$0xff]
        %v372 = vld [vmem:[%s202 + $0x30] sm:$0xff]
        %v373 = vld [vmem:[%s202 + $0x38] sm:$0xff]
        %v374 = vld [vmem:[%s202 + $0x40] sm:$0xff]
        %v375 = vld [vmem:[%s202 + $0x48] sm:$0xff]
        %v376 = vld [vmem:[%s202 + $0x50] sm:$0xff]
        %v377 = vld [vmem:[%s202 + $0x58] sm:$0xff]
        %v378 = vld [vmem:[%s202 + $0x60] sm:$0xff]
        %v379 = vld [vmem:[%s202 + $0x68] sm:$0xff]
        %v380 = vld [vmem:[%s202 + $0x70] sm:$0xff]
        %v381 = vld [vmem:[%s202 + $0x78] sm:$0xff]
        %v382 = vld [vmem:[%s202 + $0x80] sm:$0xff]
        %v383 = vld [vmem:[%s202 + $0x88] sm:$0xff]
        %v384 = vld [vmem:[%s202 + $0x90] sm:$0xff]
        %v385 = vld [vmem:[%s202 + $0x98] sm:$0xff]
        %v386 = vld [vmem:[%s202 + $0xa0] sm:$0xff]
        %v387 = vld [vmem:[%s202 + $0xa8] sm:$0xff]
        %v388 = vld [vmem:[%s202 + $0xb0] sm:$0xff]
        %v389 = vld [vmem:[%s202 + $0xb8] sm:$0xff]
        %v390 = vld [vmem:[%s202 + $0xc0] sm:$0xff]
        %v391 = vld [vmem:[%s202 + $0xc8] sm:$0xff]
        %v392 = vld [vmem:[%s202 + $0xd0] sm:$0xff]
        %v393 = vld [vmem:[%s202 + $0xd8] sm:$0xff]
        %v394 = vld [vmem:[%s202 + $0xe0] sm:$0xff]
        %v395 = vld [vmem:[%s202 + $0xe8] sm:$0xff]
        %v396 = vld [vmem:[%s202 + $0xf0] sm:$0xff]
        %v397 = vld [vmem:[%s202 + $0xf8] sm:$0xff]
        %v398 = vld [vmem:[%s202 + $0x100] sm:$0xff]
        %v399 = vld [vmem:[%s202 + $0x108] sm:$0xff]
        %v400 = vld [vmem:[%s202 + $0x110] sm:$0xff]
        %v401 = vld [vmem:[%s202 + $0x118] sm:$0xff]
        %v402 = vld [vmem:[%s202 + $0x120] sm:$0xff]
        %v403 = vld [vmem:[%s202 + $0x128] sm:$0xff]
        %v404 = vld [vmem:[%s202 + $0x130] sm:$0xff]
        %v405 = vld [vmem:[%s202 + $0x138] sm:$0xff]
        %v406 = vld [vmem:[%s202 + $0x140] sm:$0xff]
        %v407 = vld [vmem:[%s202 + $0x148] sm:$0xff]
        %v408 = vld [vmem:[%s202 + $0x150] sm:$0xff]
        %v409 = vld [vmem:[%s202 + $0x158] sm:$0xff]
        %v410 = vld [vmem:[%s202 + $0x160] sm:$0xff]
        %v411 = vld [vmem:[%s202 + $0x168] sm:$0xff]
        %v412 = vld [vmem:[%s202 + $0x170] sm:$0xff]
        %v413 = vld [vmem:[%s202 + $0x178] sm:$0xff]
        %v414 = vld [vmem:[%s202 + $0x180] sm:$0xff]
        %v415 = vld [vmem:[%s202 + $0x188] sm:$0xff]
        %v416 = vld [vmem:[%s202 + $0x190] sm:$0xff]
        %v417 = vld [vmem:[%s202 + $0x198] sm:$0xff]
        %v418 = vld [vmem:[%s202 + $0x1a0] sm:$0xff]
        %v419 = vld [vmem:[%s202 + $0x1a8] sm:$0xff]
        %v420 = vld [vmem:[%s202 + $0x1b0] sm:$0xff]
        %v421 = vld [vmem:[%s202 + $0x1b8] sm:$0xff]
        %v422 = vld [vmem:[%s202 + $0x1c0] sm:$0xff]
        %v423 = vld [vmem:[%s202 + $0x1c8] sm:$0xff]
        %v424 = vld [vmem:[%s202 + $0x1d0] sm:$0xff]
        %v425 = vld [vmem:[%s202 + $0x1d8] sm:$0xff]
        %v426 = vld [vmem:[%s202 + $0x1e0] sm:$0xff]
        %v427 = vld [vmem:[%s202 + $0x1e8] sm:$0xff]
        %v428 = vld [vmem:[%s202 + $0x1f0] sm:$0xff]
        %v429 = vld [vmem:[%s202 + $0x1f8] sm:$0xff]
        %v430 = vld [vmem:[#allocation6] sm:$0xf]
        %v431 = vld [vmem:[#allocation6 + $0x4] sm:$0xf]
        %v432 = vld [vmem:[#allocation6 + $0x8] sm:$0xf]
        %v433 = vld [vmem:[#allocation6 + $0xc] sm:$0xf]
        %v434 = vld [vmem:[#allocation6 + $0x10] sm:$0xf]
        %v435 = vld [vmem:[#allocation6 + $0x14] sm:$0xf]
        %v436 = vld [vmem:[#allocation6 + $0x18] sm:$0xf]
        %v437 = vld [vmem:[#allocation6 + $0x1c] sm:$0xf]
        %v438 = vld [vmem:[#allocation6 + $0x20] sm:$0xf]
        %v439 = vld [vmem:[#allocation6 + $0x24] sm:$0xf]
        %v440 = vld [vmem:[#allocation6 + $0x28] sm:$0xf]
        %v441 = vld [vmem:[#allocation6 + $0x2c] sm:$0xf]
        %v442 = vld [vmem:[#allocation6 + $0x30] sm:$0xf]
        %v443 = vld [vmem:[#allocation6 + $0x34] sm:$0xf]
        %v444 = vld [vmem:[#allocation6 + $0x38] sm:$0xf]
        %v445 = vld [vmem:[#allocation6 + $0x3c] sm:$0xf]
        %v446 = vld [vmem:[#allocation6 + $0x40] sm:$0xf]
        %v447 = vld [vmem:[#allocation6 + $0x44] sm:$0xf]
        %v448 = vld [vmem:[#allocation6 + $0x48] sm:$0xf]
        %v449 = vld [vmem:[#allocation6 + $0x4c] sm:$0xf]
        %v450 = vld [vmem:[#allocation6 + $0x50] sm:$0xf]
        %v451 = vld [vmem:[#allocation6 + $0x54] sm:$0xf]
        %v452 = vld [vmem:[#allocation6 + $0x58] sm:$0xf]
        %v453 = vld [vmem:[#allocation6 + $0x5c] sm:$0xf]
        %v454 = vld [vmem:[#allocation6 + $0x60] sm:$0xf]
        %v455 = vld [vmem:[#allocation6 + $0x64] sm:$0xf]
        %v456 = vld [vmem:[#allocation6 + $0x68] sm:$0xf]
        %v457 = vld [vmem:[#allocation6 + $0x6c] sm:$0xf]
        %v458 = vld [vmem:[#allocation6 + $0x70] sm:$0xf]
        %v459 = vld [vmem:[#allocation6 + $0x74] sm:$0xf]
        %v460 = vld [vmem:[#allocation6 + $0x78] sm:$0xf]
        %v461 = vld [vmem:[#allocation6 + $0x7c] sm:$0xf]
        %v526 = vunpack.c.l.b16 %v366
        %v527 = vunpack.c.h.b16 %v366
        %v528 = vunpack.c.l.b16 %v367
        %v529 = vunpack.c.h.b16 %v367
        %v530 = vunpack.c.l.b16 %v368
        %v531 = vunpack.c.h.b16 %v368
        %v532 = vunpack.c.l.b16 %v369
        %v533 = vunpack.c.h.b16 %v369
        %v534 = vunpack.c.l.b16 %v370
        %v535 = vunpack.c.h.b16 %v370
        %v536 = vunpack.c.l.b16 %v371
        %v537 = vunpack.c.h.b16 %v371
        %v538 = vunpack.c.l.b16 %v372
        %v539 = vunpack.c.h.b16 %v372
        %v540 = vunpack.c.l.b16 %v373
        %v541 = vunpack.c.h.b16 %v373
        %v542 = vunpack.c.l.b16 %v374
        %v543 = vunpack.c.h.b16 %v374
        %v544 = vunpack.c.l.b16 %v375
        %v545 = vunpack.c.h.b16 %v375
        %v546 = vunpack.c.l.b16 %v376
        %v547 = vunpack.c.h.b16 %v376
        %v548 = vunpack.c.l.b16 %v377
        %v549 = vunpack.c.h.b16 %v377
        %v550 = vunpack.c.l.b16 %v378
        %v551 = vunpack.c.h.b16 %v378
        %v552 = vunpack.c.l.b16 %v379
        %v553 = vunpack.c.h.b16 %v379
        %v554 = vunpack.c.l.b16 %v380
        %v555 = vunpack.c.h.b16 %v380
        %v556 = vunpack.c.l.b16 %v381
        %v557 = vunpack.c.h.b16 %v381
        %v558 = vunpack.c.l.b16 %v382
        %v559 = vunpack.c.h.b16 %v382
        %v560 = vunpack.c.l.b16 %v383
        %v561 = vunpack.c.h.b16 %v383
        %v562 = vunpack.c.l.b16 %v384
        %v563 = vunpack.c.h.b16 %v384
        %v564 = vunpack.c.l.b16 %v385
        %v565 = vunpack.c.h.b16 %v385
        %v566 = vunpack.c.l.b16 %v386
        %v567 = vunpack.c.h.b16 %v386
        %v568 = vunpack.c.l.b16 %v387
        %v569 = vunpack.c.h.b16 %v387
        %v570 = vunpack.c.l.b16 %v388
        %v571 = vunpack.c.h.b16 %v388
        %v572 = vunpack.c.l.b16 %v389
        %v573 = vunpack.c.h.b16 %v389
        %v574 = vunpack.c.l.b16 %v390
        %v575 = vunpack.c.h.b16 %v390
        %v576 = vunpack.c.l.b16 %v391
        %v577 = vunpack.c.h.b16 %v391
        %v578 = vunpack.c.l.b16 %v392
        %v579 = vunpack.c.h.b16 %v392
        %v580 = vunpack.c.l.b16 %v393
        %v581 = vunpack.c.h.b16 %v393
        %v582 = vunpack.c.l.b16 %v394
        %v583 = vunpack.c.h.b16 %v394
        %v584 = vunpack.c.l.b16 %v395
        %v585 = vunpack.c.h.b16 %v395
        %v586 = vunpack.c.l.b16 %v396
        %v587 = vunpack.c.h.b16 %v396
        %v588 = vunpack.c.l.b16 %v397
        %v589 = vunpack.c.h.b16 %v397
        %v590 = vunpack.c.l.b16 %v398
        %v591 = vunpack.c.h.b16 %v398
        %v592 = vunpack.c.l.b16 %v399
        %v593 = vunpack.c.h.b16 %v399
        %v594 = vunpack.c.l.b16 %v400
        %v595 = vunpack.c.h.b16 %v400
        %v596 = vunpack.c.l.b16 %v401
        %v597 = vunpack.c.h.b16 %v401
        %v598 = vunpack.c.l.b16 %v402
        %v599 = vunpack.c.h.b16 %v402
        %v600 = vunpack.c.l.b16 %v403
        %v601 = vunpack.c.h.b16 %v403
        %v602 = vunpack.c.l.b16 %v404
        %v603 = vunpack.c.h.b16 %v404
        %v604 = vunpack.c.l.b16 %v405
        %v605 = vunpack.c.h.b16 %v405
        %v606 = vunpack.c.l.b16 %v406
        %v607 = vunpack.c.h.b16 %v406
        %v608 = vunpack.c.l.b16 %v407
        %v609 = vunpack.c.h.b16 %v407
        %v610 = vunpack.c.l.b16 %v408
        %v611 = vunpack.c.h.b16 %v408
        %v612 = vunpack.c.l.b16 %v409
        %v613 = vunpack.c.h.b16 %v409
        %v614 = vunpack.c.l.b16 %v410
        %v615 = vunpack.c.h.b16 %v410
        %v616 = vunpack.c.l.b16 %v411
        %v617 = vunpack.c.h.b16 %v411
        %v618 = vunpack.c.l.b16 %v412
        %v619 = vunpack.c.h.b16 %v412
        %v620 = vunpack.c.l.b16 %v413
        %v621 = vunpack.c.h.b16 %v413
        %v622 = vunpack.c.l.b16 %v414
        %v623 = vunpack.c.h.b16 %v414
        %v624 = vunpack.c.l.b16 %v415
        %v625 = vunpack.c.h.b16 %v415
        %v626 = vunpack.c.l.b16 %v416
        %v627 = vunpack.c.h.b16 %v416
        %v628 = vunpack.c.l.b16 %v417
        %v629 = vunpack.c.h.b16 %v417
        %v630 = vunpack.c.l.b16 %v418
        %v631 = vunpack.c.h.b16 %v418
        %v632 = vunpack.c.l.b16 %v419
        %v633 = vunpack.c.h.b16 %v419
        %v634 = vunpack.c.l.b16 %v420
        %v635 = vunpack.c.h.b16 %v420
        %v636 = vunpack.c.l.b16 %v421
        %v637 = vunpack.c.h.b16 %v421
        %v638 = vunpack.c.l.b16 %v422
        %v639 = vunpack.c.h.b16 %v422
        %v640 = vunpack.c.l.b16 %v423
        %v641 = vunpack.c.h.b16 %v423
        %v642 = vunpack.c.l.b16 %v424
        %v643 = vunpack.c.h.b16 %v424
        %v644 = vunpack.c.l.b16 %v425
        %v645 = vunpack.c.h.b16 %v425
        %v646 = vunpack.c.l.b16 %v426
        %v647 = vunpack.c.h.b16 %v426
        %v648 = vunpack.c.l.b16 %v427
        %v649 = vunpack.c.h.b16 %v427
        %v650 = vunpack.c.l.b16 %v428
        %v651 = vunpack.c.h.b16 %v428
        %v652 = vunpack.c.l.b16 %v429
        %v653 = vunpack.c.h.b16 %v429
        %v654 = vpack.c.b16 %v528, %v526
        %v655 = vpack.c.b16 %v529, %v527
        %v656 = vpack.c.b16 %v532, %v530
        %v657 = vpack.c.b16 %v533, %v531
        %v658 = vpack.c.b16 %v536, %v534
        %v659 = vpack.c.b16 %v537, %v535
        %v660 = vpack.c.b16 %v540, %v538
        %v661 = vpack.c.b16 %v541, %v539
        %v662 = vpack.c.b16 %v544, %v542
        %v663 = vpack.c.b16 %v545, %v543
        %v664 = vpack.c.b16 %v548, %v546
        %v665 = vpack.c.b16 %v549, %v547
        %v666 = vpack.c.b16 %v552, %v550
        %v667 = vpack.c.b16 %v553, %v551
        %v668 = vpack.c.b16 %v556, %v554
        %v669 = vpack.c.b16 %v557, %v555
        %v670 = vpack.c.b16 %v560, %v558
        %v671 = vpack.c.b16 %v561, %v559
        %v672 = vpack.c.b16 %v564, %v562
        %v673 = vpack.c.b16 %v565, %v563
        %v674 = vpack.c.b16 %v568, %v566
        %v675 = vpack.c.b16 %v569, %v567
        %v676 = vpack.c.b16 %v572, %v570
        %v677 = vpack.c.b16 %v573, %v571
        %v678 = vpack.c.b16 %v576, %v574
        %v679 = vpack.c.b16 %v577, %v575
        %v680 = vpack.c.b16 %v580, %v578
        %v681 = vpack.c.b16 %v581, %v579
        %v682 = vpack.c.b16 %v584, %v582
        %v683 = vpack.c.b16 %v585, %v583
        %v684 = vpack.c.b16 %v588, %v586
        %v685 = vpack.c.b16 %v589, %v587
        %v686 = vpack.c.b16 %v592, %v590
        %v687 = vpack.c.b16 %v593, %v591
        %v688 = vpack.c.b16 %v596, %v594
        %v689 = vpack.c.b16 %v597, %v595
        %v690 = vpack.c.b16 %v600, %v598
        %v691 = vpack.c.b16 %v601, %v599
        %v692 = vpack.c.b16 %v604, %v602
        %v693 = vpack.c.b16 %v605, %v603
        %v694 = vpack.c.b16 %v608, %v606
        %v695 = vpack.c.b16 %v609, %v607
        %v696 = vpack.c.b16 %v612, %v610
        %v697 = vpack.c.b16 %v613, %v611
        %v698 = vpack.c.b16 %v616, %v614
        %v699 = vpack.c.b16 %v617, %v615
        %v700 = vpack.c.b16 %v620, %v618
        %v701 = vpack.c.b16 %v621, %v619
        %v702 = vpack.c.b16 %v624, %v622
        %v703 = vpack.c.b16 %v625, %v623
        %v704 = vpack.c.b16 %v628, %v626
        %v705 = vpack.c.b16 %v629, %v627
        %v706 = vpack.c.b16 %v632, %v630
        %v707 = vpack.c.b16 %v633, %v631
        %v708 = vpack.c.b16 %v636, %v634
        %v709 = vpack.c.b16 %v637, %v635
        %v710 = vpack.c.b16 %v640, %v638
        %v711 = vpack.c.b16 %v641, %v639
        %v712 = vpack.c.b16 %v644, %v642
        %v713 = vpack.c.b16 %v645, %v643
        %v714 = vpack.c.b16 %v648, %v646
        %v715 = vpack.c.b16 %v649, %v647
        %v716 = vpack.c.b16 %v652, %v650
        %v717 = vpack.c.b16 %v653, %v651
        %v814 = vunpack.c.l.b16 %v430
        %v815 = vunpack.c.l.b16 %v431
        %v816 = vunpack.c.l.b16 %v432
        %v817 = vunpack.c.l.b16 %v433
        %v818 = vunpack.c.l.b16 %v434
        %v819 = vunpack.c.l.b16 %v435
        %v820 = vunpack.c.l.b16 %v436
        %v821 = vunpack.c.l.b16 %v437
        %v822 = vunpack.c.l.b16 %v438
        %v823 = vunpack.c.l.b16 %v439
        %v824 = vunpack.c.l.b16 %v440
        %v825 = vunpack.c.l.b16 %v441
        %v826 = vunpack.c.l.b16 %v442
        %v827 = vunpack.c.l.b16 %v443
        %v828 = vunpack.c.l.b16 %v444
        %v829 = vunpack.c.l.b16 %v445
        %v830 = vunpack.c.l.b16 %v446
        %v831 = vunpack.c.l.b16 %v447
        %v832 = vunpack.c.l.b16 %v448
        %v833 = vunpack.c.l.b16 %v449
        %v834 = vunpack.c.l.b16 %v450
        %v835 = vunpack.c.l.b16 %v451
        %v836 = vunpack.c.l.b16 %v452
        %v837 = vunpack.c.l.b16 %v453
        %v838 = vunpack.c.l.b16 %v454
        %v839 = vunpack.c.l.b16 %v455
        %v840 = vunpack.c.l.b16 %v456
        %v841 = vunpack.c.l.b16 %v457
        %v842 = vunpack.c.l.b16 %v458
        %v843 = vunpack.c.l.b16 %v459
        %v844 = vunpack.c.l.b16 %v460
        %v845 = vunpack.c.l.b16 %v461
        %v846 = vpack.c.b16 %v815, %v814
        %v847 = vpack.c.b16 %v817, %v816
        %v848 = vpack.c.b16 %v819, %v818
        %v849 = vpack.c.b16 %v821, %v820
        %v850 = vpack.c.b16 %v823, %v822
        %v851 = vpack.c.b16 %v825, %v824
        %v852 = vpack.c.b16 %v827, %v826
        %v853 = vpack.c.b16 %v829, %v828
        %v854 = vpack.c.b16 %v831, %v830
        %v855 = vpack.c.b16 %v833, %v832
        %v856 = vpack.c.b16 %v835, %v834
        %v857 = vpack.c.b16 %v837, %v836
        %v858 = vpack.c.b16 %v839, %v838
        %v859 = vpack.c.b16 %v841, %v840
        %v860 = vpack.c.b16 %v843, %v842
        %v861 = vpack.c.b16 %v845, %v844
        %878 = vmatprep.subr.bf16.mxu0 0
        %879 = vmatpush1.bf16.msra.mxu0 %v846
        %880 = vmatprep.subr.bf16.mxu0 0
        %881 = vmatpush1.bf16.msra.mxu0 %v847
        %882 = vmatprep.subr.bf16.mxu0 0
        %883 = vmatpush1.bf16.msra.mxu0 %v848
        %884 = vmatprep.subr.bf16.mxu0 0
        %885 = vmatpush1.bf16.msra.mxu0 %v849
        %886 = vmatprep.subr.bf16.mxu0 0
        %887 = vmatpush1.bf16.msra.mxu0 %v850
        %888 = vmatprep.subr.bf16.mxu0 0
        %889 = vmatpush1.bf16.msra.mxu0 %v851
        %890 = vmatprep.subr.bf16.mxu0 0
        %891 = vmatpush1.bf16.msra.mxu0 %v852
        %892 = vmatprep.subr.bf16.mxu0 0
        %893 = vmatpush1.bf16.msra.mxu0 %v853
        %894 = vmatprep.subr.bf16.mxu0 0
        %895 = vmatpush1.bf16.msra.mxu0 %v854
        %896 = vmatprep.subr.bf16.mxu0 0
        %897 = vmatpush1.bf16.msra.mxu0 %v855
        %898 = vmatprep.subr.bf16.mxu0 0
        %899 = vmatpush1.bf16.msra.mxu0 %v856
        %900 = vmatprep.subr.bf16.mxu0 0
        %901 = vmatpush1.bf16.msra.mxu0 %v857
        %902 = vmatprep.subr.bf16.mxu0 0
        %903 = vmatpush1.bf16.msra.mxu0 %v858
        %904 = vmatprep.subr.bf16.mxu0 0
        %905 = vmatpush1.bf16.msra.mxu0 %v859
        %906 = vmatprep.subr.bf16.mxu0 0
        %907 = vmatpush1.bf16.msra.mxu0 %v860
        %908 = vmatprep.subr.bf16.mxu0 0
        %909 = vmatpush1.bf16.msra.mxu0 %v861
        %910 = vmatprep.mubr.bf16.mxu0 %v655
        %911 = vmatmul.mubr.bf16.gmra.mrb[0].mxu0 %v654
        %v912 = vpop.f32.mrb[0].mxu0
        %v913 = vadd.f32 0.0, %v912
        %v914 = vpop.f32.mrb[0].mxu0
        %v915 = vpop.f32.mrb[0].mxu0
        %v916 = vadd.f32 0.0, %v915
        %v917 = vpop.f32.mrb[0].mxu0
        %918 = vmatprep.mubr.bf16.mxu0 %v657
        %919 = vmatmul.mubr.bf16.gmra.mrb[0].mxu0 %v656
        %v920 = vpop.f32.mrb[0].mxu0
        %v921 = vadd.f32 0.0, %v920
        %v922 = vpop.f32.mrb[0].mxu0
        %v923 = vpop.f32.mrb[0].mxu0
        %v924 = vadd.f32 0.0, %v923
        %v925 = vpop.f32.mrb[0].mxu0
        %926 = vmatprep.mubr.bf16.mxu0 %v659
        %927 = vmatmul.mubr.bf16.gmra.mrb[0].mxu0 %v658
        %v928 = vpop.f32.mrb[0].mxu0
        %v929 = vadd.f32 0.0, %v928
        %v930 = vpop.f32.mrb[0].mxu0
        %v931 = vpop.f32.mrb[0].mxu0
        %v932 = vadd.f32 0.0, %v931
        %v933 = vpop.f32.mrb[0].mxu0
        %934 = vmatprep.mubr.bf16.mxu0 %v661
        %935 = vmatmul.mubr.bf16.gmra.mrb[0].mxu0 %v660
        %v936 = vpop.f32.mrb[0].mxu0
        %v937 = vadd.f32 0.0, %v936
        %v938 = vpop.f32.mrb[0].mxu0
        %v939 = vpop.f32.mrb[0].mxu0
        %v940 = vadd.f32 0.0, %v939
        %v941 = vpop.f32.mrb[0].mxu0
        %942 = vmatprep.mubr.bf16.mxu0 %v663
        %943 = vmatmul.mubr.bf16.gmra.mrb[0].mxu0 %v662
        %v944 = vpop.f32.mrb[0].mxu0
        %v945 = vadd.f32 0.0, %v944
        %v946 = vpop.f32.mrb[0].mxu0
        %v947 = vpop.f32.mrb[0].mxu0
        %v948 = vadd.f32 0.0, %v947
        %v949 = vpop.f32.mrb[0].mxu0
        %950 = vmatprep.mubr.bf16.mxu0 %v665
        %951 = vmatmul.mubr.bf16.gmra.mrb[0].mxu0 %v664
        %v952 = vpop.f32.mrb[0].mxu0
        %v953 = vadd.f32 0.0, %v952
        %v954 = vpop.f32.mrb[0].mxu0
        %v955 = vpop.f32.mrb[0].mxu0
        %v956 = vadd.f32 0.0, %v955
        %v957 = vpop.f32.mrb[0].mxu0
        %958 = vmatprep.mubr.bf16.mxu0 %v667
        %959 = vmatmul.mubr.bf16.gmra.mrb[0].mxu0 %v666
        %v960 = vpop.f32.mrb[0].mxu0
        %v961 = vadd.f32 0.0, %v960
        %v962 = vpop.f32.mrb[0].mxu0
        %v963 = vpop.f32.mrb[0].mxu0
        %v964 = vadd.f32 0.0, %v963
        %v965 = vpop.f32.mrb[0].mxu0
        %966 = vmatprep.mubr.bf16.mxu0 %v669
        %967 = vmatmul.mubr.bf16.gmra.mrb[0].mxu0 %v668
        %v968 = vpop.f32.mrb[0].mxu0
        %v969 = vadd.f32 0.0, %v968
        %v970 = vpop.f32.mrb[0].mxu0
        %v971 = vpop.f32.mrb[0].mxu0
        %v972 = vadd.f32 0.0, %v971
        %v973 = vpop.f32.mrb[0].mxu0
        %974 = vmatprep.mubr.bf16.mxu0 %v671
        %975 = vmatmul.mubr.bf16.gmra.mrb[0].mxu0 %v670
        %v976 = vpop.f32.mrb[0].mxu0
        %v977 = vadd.f32 0.0, %v976
        %v978 = vpop.f32.mrb[0].mxu0
        %v979 = vpop.f32.mrb[0].mxu0
        %v980 = vadd.f32 0.0, %v979
        %v981 = vpop.f32.mrb[0].mxu0
        %982 = vmatprep.mubr.bf16.mxu0 %v673
        %983 = vmatmul.mubr.bf16.gmra.mrb[0].mxu0 %v672
        %v984 = vpop.f32.mrb[0].mxu0
        %v985 = vadd.f32 0.0, %v984
        %v986 = vpop.f32.mrb[0].mxu0
        %v987 = vpop.f32.mrb[0].mxu0
        %v988 = vadd.f32 0.0, %v987
        %v989 = vpop.f32.mrb[0].mxu0
        %990 = vmatprep.mubr.bf16.mxu0 %v675
        %991 = vmatmul.mubr.bf16.gmra.mrb[0].mxu0 %v674
        %v992 = vpop.f32.mrb[0].mxu0
        %v993 = vadd.f32 0.0, %v992
        %v994 = vpop.f32.mrb[0].mxu0
        %v995 = vpop.f32.mrb[0].mxu0
        %v996 = vadd.f32 0.0, %v995
        %v997 = vpop.f32.mrb[0].mxu0
        %998 = vmatprep.mubr.bf16.mxu0 %v677
        %999 = vmatmul.mubr.bf16.gmra.mrb[0].mxu0 %v676
        %v1000 = vpop.f32.mrb[0].mxu0
        %v1001 = vadd.f32 0.0, %v1000
        %v1002 = vpop.f32.mrb[0].mxu0
        %v1003 = vpop.f32.mrb[0].mxu0
        %v1004 = vadd.f32 0.0, %v1003
        %v1005 = vpop.f32.mrb[0].mxu0
        %1006 = vmatprep.mubr.bf16.mxu0 %v679
        %1007 = vmatmul.mubr.bf16.gmra.mrb[0].mxu0 %v678
        %v1008 = vpop.f32.mrb[0].mxu0
        %v1009 = vadd.f32 0.0, %v1008
        %v1010 = vpop.f32.mrb[0].mxu0
        %v1011 = vpop.f32.mrb[0].mxu0
        %v1012 = vadd.f32 0.0, %v1011
        %v1013 = vpop.f32.mrb[0].mxu0
        %1014 = vmatprep.mubr.bf16.mxu0 %v681
        %1015 = vmatmul.mubr.bf16.gmra.mrb[0].mxu0 %v680
        %v1016 = vpop.f32.mrb[0].mxu0
        %v1017 = vadd.f32 0.0, %v1016
        %v1018 = vpop.f32.mrb[0].mxu0
        %v1019 = vpop.f32.mrb[0].mxu0
        %v1020 = vadd.f32 0.0, %v1019
        %v1021 = vpop.f32.mrb[0].mxu0
        %1022 = vmatprep.mubr.bf16.mxu0 %v683
        %1023 = vmatmul.mubr.bf16.gmra.mrb[0].mxu0 %v682
        %v1024 = vpop.f32.mrb[0].mxu0
        %v1025 = vadd.f32 0.0, %v1024
        %v1026 = vpop.f32.mrb[0].mxu0
        %v1027 = vpop.f32.mrb[0].mxu0
        %v1028 = vadd.f32 0.0, %v1027
        %v1029 = vpop.f32.mrb[0].mxu0
        %1030 = vmatprep.mubr.bf16.mxu0 %v685
        %1031 = vmatmul.mubr.bf16.gmra.mrb[0].mxu0 %v684
        %v1032 = vpop.f32.mrb[0].mxu0
        %v1033 = vadd.f32 0.0, %v1032
        %v1034 = vpop.f32.mrb[0].mxu0
        %v1035 = vpop.f32.mrb[0].mxu0
        %v1036 = vadd.f32 0.0, %v1035
        %v1037 = vpop.f32.mrb[0].mxu0
        %1038 = vmatprep.mubr.bf16.mxu0 %v687
        %1039 = vmatmul.mubr.bf16.gmra.mrb[0].mxu0 %v686
        %v1040 = vpop.f32.mrb[0].mxu0
        %v1041 = vadd.f32 0.0, %v1040
        %v1042 = vpop.f32.mrb[0].mxu0
        %v1043 = vpop.f32.mrb[0].mxu0
        %v1044 = vadd.f32 0.0, %v1043
        %v1045 = vpop.f32.mrb[0].mxu0
        %1046 = vmatprep.mubr.bf16.mxu0 %v689
        %1047 = vmatmul.mubr.bf16.gmra.mrb[0].mxu0 %v688
        %v1048 = vpop.f32.mrb[0].mxu0
        %v1049 = vadd.f32 0.0, %v1048
        %v1050 = vpop.f32.mrb[0].mxu0
        %v1051 = vpop.f32.mrb[0].mxu0
        %v1052 = vadd.f32 0.0, %v1051
        %v1053 = vpop.f32.mrb[0].mxu0
        %1054 = vmatprep.mubr.bf16.mxu0 %v691
        %1055 = vmatmul.mubr.bf16.gmra.mrb[0].mxu0 %v690
        %v1056 = vpop.f32.mrb[0].mxu0
        %v1057 = vadd.f32 0.0, %v1056
        %v1058 = vpop.f32.mrb[0].mxu0
        %v1059 = vpop.f32.mrb[0].mxu0
        %v1060 = vadd.f32 0.0, %v1059
        %v1061 = vpop.f32.mrb[0].mxu0
        %1062 = vmatprep.mubr.bf16.mxu0 %v693
        %1063 = vmatmul.mubr.bf16.gmra.mrb[0].mxu0 %v692
        %v1064 = vpop.f32.mrb[0].mxu0
        %v1065 = vadd.f32 0.0, %v1064
        %v1066 = vpop.f32.mrb[0].mxu0
        %v1067 = vpop.f32.mrb[0].mxu0
        %v1068 = vadd.f32 0.0, %v1067
        %v1069 = vpop.f32.mrb[0].mxu0
        %1070 = vmatprep.mubr.bf16.mxu0 %v695
        %1071 = vmatmul.mubr.bf16.gmra.mrb[0].mxu0 %v694
        %v1072 = vpop.f32.mrb[0].mxu0
        %v1073 = vadd.f32 0.0, %v1072
        %v1074 = vpop.f32.mrb[0].mxu0
        %v1075 = vpop.f32.mrb[0].mxu0
        %v1076 = vadd.f32 0.0, %v1075
        %v1077 = vpop.f32.mrb[0].mxu0
        %1078 = vmatprep.mubr.bf16.mxu0 %v697
        %1079 = vmatmul.mubr.bf16.gmra.mrb[0].mxu0 %v696
        %v1080 = vpop.f32.mrb[0].mxu0
        %v1081 = vadd.f32 0.0, %v1080
        %v1082 = vpop.f32.mrb[0].mxu0
        %v1083 = vpop.f32.mrb[0].mxu0
        %v1084 = vadd.f32 0.0, %v1083
        %v1085 = vpop.f32.mrb[0].mxu0
        %1086 = vmatprep.mubr.bf16.mxu0 %v699
        %1087 = vmatmul.mubr.bf16.gmra.mrb[0].mxu0 %v698
        %v1088 = vpop.f32.mrb[0].mxu0
        %v1089 = vadd.f32 0.0, %v1088
        %v1090 = vpop.f32.mrb[0].mxu0
        %v1091 = vpop.f32.mrb[0].mxu0
        %v1092 = vadd.f32 0.0, %v1091
        %v1093 = vpop.f32.mrb[0].mxu0
        %1094 = vmatprep.mubr.bf16.mxu0 %v701
        %1095 = vmatmul.mubr.bf16.gmra.mrb[0].mxu0 %v700
        %v1096 = vpop.f32.mrb[0].mxu0
        %v1097 = vadd.f32 0.0, %v1096
        %v1098 = vpop.f32.mrb[0].mxu0
        %v1099 = vpop.f32.mrb[0].mxu0
        %v1100 = vadd.f32 0.0, %v1099
        %v1101 = vpop.f32.mrb[0].mxu0
        %1102 = vmatprep.mubr.bf16.mxu0 %v703
        %1103 = vmatmul.mubr.bf16.gmra.mrb[0].mxu0 %v702
        %v1104 = vpop.f32.mrb[0].mxu0
        %v1105 = vadd.f32 0.0, %v1104
        %v1106 = vpop.f32.mrb[0].mxu0
        %v1107 = vpop.f32.mrb[0].mxu0
        %v1108 = vadd.f32 0.0, %v1107
        %v1109 = vpop.f32.mrb[0].mxu0
        %1110 = vmatprep.mubr.bf16.mxu0 %v705
        %1111 = vmatmul.mubr.bf16.gmra.mrb[0].mxu0 %v704
        %v1112 = vpop.f32.mrb[0].mxu0
        %v1113 = vadd.f32 0.0, %v1112
        %v1114 = vpop.f32.mrb[0].mxu0
        %v1115 = vpop.f32.mrb[0].mxu0
        %v1116 = vadd.f32 0.0, %v1115
        %v1117 = vpop.f32.mrb[0].mxu0
        %1118 = vmatprep.mubr.bf16.mxu0 %v707
        %1119 = vmatmul.mubr.bf16.gmra.mrb[0].mxu0 %v706
        %v1120 = vpop.f32.mrb[0].mxu0
        %v1121 = vadd.f32 0.0, %v1120
        %v1122 = vpop.f32.mrb[0].mxu0
        %v1123 = vpop.f32.mrb[0].mxu0
        %v1124 = vadd.f32 0.0, %v1123
        %v1125 = vpop.f32.mrb[0].mxu0
        %1126 = vmatprep.mubr.bf16.mxu0 %v709
        %1127 = vmatmul.mubr.bf16.gmra.mrb[0].mxu0 %v708
        %v1128 = vpop.f32.mrb[0].mxu0
        %v1129 = vadd.f32 0.0, %v1128
        %v1130 = vpop.f32.mrb[0].mxu0
        %v1131 = vpop.f32.mrb[0].mxu0
        %v1132 = vadd.f32 0.0, %v1131
        %v1133 = vpop.f32.mrb[0].mxu0
        %1134 = vmatprep.mubr.bf16.mxu0 %v711
        %1135 = vmatmul.mubr.bf16.gmra.mrb[0].mxu0 %v710
        %v1136 = vpop.f32.mrb[0].mxu0
        %v1137 = vadd.f32 0.0, %v1136
        %v1138 = vpop.f32.mrb[0].mxu0
        %v1139 = vpop.f32.mrb[0].mxu0
        %v1140 = vadd.f32 0.0, %v1139
        %v1141 = vpop.f32.mrb[0].mxu0
        %1142 = vmatprep.mubr.bf16.mxu0 %v713
        %1143 = vmatmul.mubr.bf16.gmra.mrb[0].mxu0 %v712
        %v1144 = vpop.f32.mrb[0].mxu0
        %v1145 = vadd.f32 0.0, %v1144
        %v1146 = vpop.f32.mrb[0].mxu0
        %v1147 = vpop.f32.mrb[0].mxu0
        %v1148 = vadd.f32 0.0, %v1147
        %v1149 = vpop.f32.mrb[0].mxu0
        %1150 = vmatprep.mubr.bf16.mxu0 %v715
        %1151 = vmatmul.mubr.bf16.gmra.mrb[0].mxu0 %v714
        %v1152 = vpop.f32.mrb[0].mxu0
        %v1153 = vadd.f32 0.0, %v1152
        %v1154 = vpop.f32.mrb[0].mxu0
        %v1155 = vpop.f32.mrb[0].mxu0
        %v1156 = vadd.f32 0.0, %v1155
        %v1157 = vpop.f32.mrb[0].mxu0
        %1158 = vmatprep.mubr.bf16.mxu0 %v717
        %1159 = vmatmul.mubr.bf16.gmra.mrb[0].mxu0 %v716
        %v1160 = vpop.f32.mrb[0].mxu0
        %v1161 = vadd.f32 0.0, %v1160
        %v1162 = vpop.f32.mrb[0].mxu0
        %v1163 = vpop.f32.mrb[0].mxu0
        %v1164 = vadd.f32 0.0, %v1163
        %v1165 = vpop.f32.mrb[0].mxu0
        %1166 = vdwg.mxu0
        %v1167 = vadd.f32 %v302, %v913
        %v1168 = vadd.f32 %v303, %v916
        %v1169 = vadd.f32 %v304, %v921
        %v1170 = vadd.f32 %v305, %v924
        %v1171 = vadd.f32 %v306, %v929
        %v1172 = vadd.f32 %v307, %v932
        %v1173 = vadd.f32 %v308, %v937
        %v1174 = vadd.f32 %v309, %v940
        %v1175 = vadd.f32 %v310, %v945
        %v1176 = vadd.f32 %v311, %v948
        %v1177 = vadd.f32 %v312, %v953
        %v1178 = vadd.f32 %v313, %v956
        %v1179 = vadd.f32 %v314, %v961
        %v1180 = vadd.f32 %v315, %v964
        %v1181 = vadd.f32 %v316, %v969
        %v1182 = vadd.f32 %v317, %v972
        %v1183 = vadd.f32 %v318, %v977
        %v1184 = vadd.f32 %v319, %v980
        %v1185 = vadd.f32 %v320, %v985
        %v1186 = vadd.f32 %v321, %v988
        %v1187 = vadd.f32 %v322, %v993
        %v1188 = vadd.f32 %v323, %v996
        %v1189 = vadd.f32 %v324, %v1001
        %v1190 = vadd.f32 %v325, %v1004
        %v1191 = vadd.f32 %v326, %v1009
        %v1192 = vadd.f32 %v327, %v1012
        %v1193 = vadd.f32 %v328, %v1017
        %v1194 = vadd.f32 %v329, %v1020
        %v1195 = vadd.f32 %v330, %v1025
        %v1196 = vadd.f32 %v331, %v1028
        %v1197 = vadd.f32 %v332, %v1033
        %v1198 = vadd.f32 %v333, %v1036
        %v1199 = vadd.f32 %v334, %v1041
        %v1200 = vadd.f32 %v335, %v1044
        %v1201 = vadd.f32 %v336, %v1049
        %v1202 = vadd.f32 %v337, %v1052
        %v1203 = vadd.f32 %v338, %v1057
        %v1204 = vadd.f32 %v339, %v1060
        %v1205 = vadd.f32 %v340, %v1065
        %v1206 = vadd.f32 %v341, %v1068
        %v1207 = vadd.f32 %v342, %v1073
        %v1208 = vadd.f32 %v343, %v1076
        %v1209 = vadd.f32 %v344, %v1081
        %v1210 = vadd.f32 %v345, %v1084
        %v1211 = vadd.f32 %v346, %v1089
        %v1212 = vadd.f32 %v347, %v1092
        %v1213 = vadd.f32 %v348, %v1097
        %v1214 = vadd.f32 %v349, %v1100
        %v1215 = vadd.f32 %v350, %v1105
        %v1216 = vadd.f32 %v351, %v1108
        %v1217 = vadd.f32 %v352, %v1113
        %v1218 = vadd.f32 %v353, %v1116
        %v1219 = vadd.f32 %v354, %v1121
        %v1220 = vadd.f32 %v355, %v1124
        %v1221 = vadd.f32 %v356, %v1129
        %v1222 = vadd.f32 %v357, %v1132
        %v1223 = vadd.f32 %v358, %v1137
        %v1224 = vadd.f32 %v359, %v1140
        %v1225 = vadd.f32 %v360, %v1145
        %v1226 = vadd.f32 %v361, %v1148
        %v1227 = vadd.f32 %v362, %v1153
        %v1228 = vadd.f32 %v363, %v1156
        %v1229 = vadd.f32 %v364, %v1161
        %v1230 = vadd.f32 %v365, %v1164
        %1231 = vst [vmem:[#allocation2] sm:$0xff] %v1167
        %1232 = vst [vmem:[#allocation2 + $0x8] sm:$0xff] %v1168
        %1233 = vst [vmem:[#allocation2 + $0x10] sm:$0xff] %v1169
        %1234 = vst [vmem:[#allocation2 + $0x18] sm:$0xff] %v1170
        %1235 = vst [vmem:[#allocation2 + $0x20] sm:$0xff] %v1171
        %1236 = vst [vmem:[#allocation2 + $0x28] sm:$0xff] %v1172
        %1237 = vst [vmem:[#allocation2 + $0x30] sm:$0xff] %v1173
        %1238 = vst [vmem:[#allocation2 + $0x38] sm:$0xff] %v1174
        %1239 = vst [vmem:[#allocation2 + $0x40] sm:$0xff] %v1175
        %1240 = vst [vmem:[#allocation2 + $0x48] sm:$0xff] %v1176
        %1241 = vst [vmem:[#allocation2 + $0x50] sm:$0xff] %v1177
        %1242 = vst [vmem:[#allocation2 + $0x58] sm:$0xff] %v1178
        %1243 = vst [vmem:[#allocation2 + $0x60] sm:$0xff] %v1179
        %1244 = vst [vmem:[#allocation2 + $0x68] sm:$0xff] %v1180
        %1245 = vst [vmem:[#allocation2 + $0x70] sm:$0xff] %v1181
        %1246 = vst [vmem:[#allocation2 + $0x78] sm:$0xff] %v1182
        %1247 = vst [vmem:[#allocation2 + $0x80] sm:$0xff] %v1183
        %1248 = vst [vmem:[#allocation2 + $0x88] sm:$0xff] %v1184
        %1249 = vst [vmem:[#allocation2 + $0x90] sm:$0xff] %v1185
        %1250 = vst [vmem:[#allocation2 + $0x98] sm:$0xff] %v1186
        %1251 = vst [vmem:[#allocation2 + $0xa0] sm:$0xff] %v1187
        %1252 = vst [vmem:[#allocation2 + $0xa8] sm:$0xff] %v1188
        %1253 = vst [vmem:[#allocation2 + $0xb0] sm:$0xff] %v1189
        %1254 = vst [vmem:[#allocation2 + $0xb8] sm:$0xff] %v1190
        %1255 = vst [vmem:[#allocation2 + $0xc0] sm:$0xff] %v1191
        %1256 = vst [vmem:[#allocation2 + $0xc8] sm:$0xff] %v1192
        %1257 = vst [vmem:[#allocation2 + $0xd0] sm:$0xff] %v1193
        %1258 = vst [vmem:[#allocation2 + $0xd8] sm:$0xff] %v1194
        %1259 = vst [vmem:[#allocation2 + $0xe0] sm:$0xff] %v1195
        %1260 = vst [vmem:[#allocation2 + $0xe8] sm:$0xff] %v1196
        %1261 = vst [vmem:[#allocation2 + $0xf0] sm:$0xff] %v1197
        %1262 = vst [vmem:[#allocation2 + $0xf8] sm:$0xff] %v1198
        %1263 = vst [vmem:[#allocation2 + $0x100] sm:$0xff] %v1199
        %1264 = vst [vmem:[#allocation2 + $0x108] sm:$0xff] %v1200
        %1265 = vst [vmem:[#allocation2 + $0x110] sm:$0xff] %v1201
        %1266 = vst [vmem:[#allocation2 + $0x118] sm:$0xff] %v1202
        %1267 = vst [vmem:[#allocation2 + $0x120] sm:$0xff] %v1203
        %1268 = vst [vmem:[#allocation2 + $0x128] sm:$0xff] %v1204
        %1269 = vst [vmem:[#allocation2 + $0x130] sm:$0xff] %v1205
        %1270 = vst [vmem:[#allocation2 + $0x138] sm:$0xff] %v1206
        %1271 = vst [vmem:[#allocation2 + $0x140] sm:$0xff] %v1207
        %1272 = vst [vmem:[#allocation2 + $0x148] sm:$0xff] %v1208
        %1273 = vst [vmem:[#allocation2 + $0x150] sm:$0xff] %v1209
        %1274 = vst [vmem:[#allocation2 + $0x158] sm:$0xff] %v1210
        %1275 = vst [vmem:[#allocation2 + $0x160] sm:$0xff] %v1211
        %1276 = vst [vmem:[#allocation2 + $0x168] sm:$0xff] %v1212
        %1277 = vst [vmem:[#allocation2 + $0x170] sm:$0xff] %v1213
        %1278 = vst [vmem:[#allocation2 + $0x178] sm:$0xff] %v1214
        %1279 = vst [vmem:[#allocation2 + $0x180] sm:$0xff] %v1215
        %1280 = vst [vmem:[#allocation2 + $0x188] sm:$0xff] %v1216
        %1281 = vst [vmem:[#allocation2 + $0x190] sm:$0xff] %v1217
        %1282 = vst [vmem:[#allocation2 + $0x198] sm:$0xff] %v1218
        %1283 = vst [vmem:[#allocation2 + $0x1a0] sm:$0xff] %v1219
        %1284 = vst [vmem:[#allocation2 + $0x1a8] sm:$0xff] %v1220
        %1285 = vst [vmem:[#allocation2 + $0x1b0] sm:$0xff] %v1221
        %1286 = vst [vmem:[#allocation2 + $0x1b8] sm:$0xff] %v1222
        %1287 = vst [vmem:[#allocation2 + $0x1c0] sm:$0xff] %v1223
        %1288 = vst [vmem:[#allocation2 + $0x1c8] sm:$0xff] %v1224
        %1289 = vst [vmem:[#allocation2 + $0x1d0] sm:$0xff] %v1225
        %1290 = vst [vmem:[#allocation2 + $0x1d8] sm:$0xff] %v1226
        %1291 = vst [vmem:[#allocation2 + $0x1e0] sm:$0xff] %v1227
        %1292 = vst [vmem:[#allocation2 + $0x1e8] sm:$0xff] %v1228
        %1293 = vst [vmem:[#allocation2 + $0x1f0] sm:$0xff] %v1229
        %1294 = vst [vmem:[#allocation2 + $0x1f8] sm:$0xff] %v1230
        // Predicated region
        $region45: #{tpu_custom_call.1} parent=31 // pred_check
          %p1295 = pneg %p234
        $region46: #{tpu_custom_call.1} parent=31 // pred_check_branch
          %1297 = sbr.rel (%p1295) target = $region48
        $region47: #{tpu_custom_call.1} parent=31 // pred_region
          %v1298 = vld [vmem:[#allocation2] sm:$0xff]
          %v1299 = vld [vmem:[#allocation2 + $0x8] sm:$0xff]
          %v1300 = vld [vmem:[#allocation2 + $0x10] sm:$0xff]
          %v1301 = vld [vmem:[#allocation2 + $0x18] sm:$0xff]
          %v1302 = vld [vmem:[#allocation2 + $0x20] sm:$0xff]
          %v1303 = vld [vmem:[#allocation2 + $0x28] sm:$0xff]
          %v1304 = vld [vmem:[#allocation2 + $0x30] sm:$0xff]
          %v1305 = vld [vmem:[#allocation2 + $0x38] sm:$0xff]
          %v1306 = vld [vmem:[#allocation2 + $0x40] sm:$0xff]
          %v1307 = vld [vmem:[#allocation2 + $0x48] sm:$0xff]
          %v1308 = vld [vmem:[#allocation2 + $0x50] sm:$0xff]
          %v1309 = vld [vmem:[#allocation2 + $0x58] sm:$0xff]
          %v1310 = vld [vmem:[#allocation2 + $0x60] sm:$0xff]
          %v1311 = vld [vmem:[#allocation2 + $0x68] sm:$0xff]
          %v1312 = vld [vmem:[#allocation2 + $0x70] sm:$0xff]
          %v1313 = vld [vmem:[#allocation2 + $0x78] sm:$0xff]
          %v1314 = vld [vmem:[#allocation2 + $0x80] sm:$0xff]
          %v1315 = vld [vmem:[#allocation2 + $0x88] sm:$0xff]
          %v1316 = vld [vmem:[#allocation2 + $0x90] sm:$0xff]
          %v1317 = vld [vmem:[#allocation2 + $0x98] sm:$0xff]
          %v1318 = vld [vmem:[#allocation2 + $0xa0] sm:$0xff]
          %v1319 = vld [vmem:[#allocation2 + $0xa8] sm:$0xff]
          %v1320 = vld [vmem:[#allocation2 + $0xb0] sm:$0xff]
          %v1321 = vld [vmem:[#allocation2 + $0xb8] sm:$0xff]
          %v1322 = vld [vmem:[#allocation2 + $0xc0] sm:$0xff]
          %v1323 = vld [vmem:[#allocation2 + $0xc8] sm:$0xff]
          %v1324 = vld [vmem:[#allocation2 + $0xd0] sm:$0xff]
          %v1325 = vld [vmem:[#allocation2 + $0xd8] sm:$0xff]
          %v1326 = vld [vmem:[#allocation2 + $0xe0] sm:$0xff]
          %v1327 = vld [vmem:[#allocation2 + $0xe8] sm:$0xff]
          %v1328 = vld [vmem:[#allocation2 + $0xf0] sm:$0xff]
          %v1329 = vld [vmem:[#allocation2 + $0xf8] sm:$0xff]
          %v1330 = vld [vmem:[#allocation2 + $0x100] sm:$0xff]
          %v1331 = vld [vmem:[#allocation2 + $0x108] sm:$0xff]
          %v1332 = vld [vmem:[#allocation2 + $0x110] sm:$0xff]
          %v1333 = vld [vmem:[#allocation2 + $0x118] sm:$0xff]
          %v1334 = vld [vmem:[#allocation2 + $0x120] sm:$0xff]
          %v1335 = vld [vmem:[#allocation2 + $0x128] sm:$0xff]
          %v1336 = vld [vmem:[#allocation2 + $0x130] sm:$0xff]
          %v1337 = vld [vmem:[#allocation2 + $0x138] sm:$0xff]
          %v1338 = vld [vmem:[#allocation2 + $0x140] sm:$0xff]
          %v1339 = vld [vmem:[#allocation2 + $0x148] sm:$0xff]
          %v1340 = vld [vmem:[#allocation2 + $0x150] sm:$0xff]
          %v1341 = vld [vmem:[#allocation2 + $0x158] sm:$0xff]
          %v1342 = vld [vmem:[#allocation2 + $0x160] sm:$0xff]
          %v1343 = vld [vmem:[#allocation2 + $0x168] sm:$0xff]
          %v1344 = vld [vmem:[#allocation2 + $0x170] sm:$0xff]
          %v1345 = vld [vmem:[#allocation2 + $0x178] sm:$0xff]
          %v1346 = vld [vmem:[#allocation2 + $0x180] sm:$0xff]
          %v1347 = vld [vmem:[#allocation2 + $0x188] sm:$0xff]
          %v1348 = vld [vmem:[#allocation2 + $0x190] sm:$0xff]
          %v1349 = vld [vmem:[#allocation2 + $0x198] sm:$0xff]
          %v1350 = vld [vmem:[#allocation2 + $0x1a0] sm:$0xff]
          %v1351 = vld [vmem:[#allocation2 + $0x1a8] sm:$0xff]
          %v1352 = vld [vmem:[#allocation2 + $0x1b0] sm:$0xff]
          %v1353 = vld [vmem:[#allocation2 + $0x1b8] sm:$0xff]
          %v1354 = vld [vmem:[#allocation2 + $0x1c0] sm:$0xff]
          %v1355 = vld [vmem:[#allocation2 + $0x1c8] sm:$0xff]
          %v1356 = vld [vmem:[#allocation2 + $0x1d0] sm:$0xff]
          %v1357 = vld [vmem:[#allocation2 + $0x1d8] sm:$0xff]
          %v1358 = vld [vmem:[#allocation2 + $0x1e0] sm:$0xff]
          %v1359 = vld [vmem:[#allocation2 + $0x1e8] sm:$0xff]
          %v1360 = vld [vmem:[#allocation2 + $0x1f0] sm:$0xff]
          %v1361 = vld [vmem:[#allocation2 + $0x1f8] sm:$0xff]
          %v1362 = vld [vmem:[%s2] sm:$0x1]
          %v1364 = vlaneseq
          %v1365 = vshrl.u32 %v1364, 7
          %v1366 = vsub.s32 0, %v1365
          %v1367 = vrot.slane %v1362, %v1366
          %v1369 = vadd.f32 %v1298, %v1367
          %v1370 = vadd.f32 %v1299, %v1367
          %v1371 = vadd.f32 %v1300, %v1367
          %v1372 = vadd.f32 %v1301, %v1367
          %v1373 = vadd.f32 %v1302, %v1367
          %v1374 = vadd.f32 %v1303, %v1367
          %v1375 = vadd.f32 %v1304, %v1367
          %v1376 = vadd.f32 %v1305, %v1367
          %v1377 = vadd.f32 %v1306, %v1367
          %v1378 = vadd.f32 %v1307, %v1367
          %v1379 = vadd.f32 %v1308, %v1367
          %v1380 = vadd.f32 %v1309, %v1367
          %v1381 = vadd.f32 %v1310, %v1367
          %v1382 = vadd.f32 %v1311, %v1367
          %v1383 = vadd.f32 %v1312, %v1367
          %v1384 = vadd.f32 %v1313, %v1367
          %v1385 = vadd.f32 %v1314, %v1367
          %v1386 = vadd.f32 %v1315, %v1367
          %v1387 = vadd.f32 %v1316, %v1367
          %v1388 = vadd.f32 %v1317, %v1367
          %v1389 = vadd.f32 %v1318, %v1367
          %v1390 = vadd.f32 %v1319, %v1367
          %v1391 = vadd.f32 %v1320, %v1367
          %v1392 = vadd.f32 %v1321, %v1367
          %v1393 = vadd.f32 %v1322, %v1367
          %v1394 = vadd.f32 %v1323, %v1367
          %v1395 = vadd.f32 %v1324, %v1367
          %v1396 = vadd.f32 %v1325, %v1367
          %v1397 = vadd.f32 %v1326, %v1367
          %v1398 = vadd.f32 %v1327, %v1367
          %v1399 = vadd.f32 %v1328, %v1367
          %v1400 = vadd.f32 %v1329, %v1367
          %v1401 = vadd.f32 %v1330, %v1367
          %v1402 = vadd.f32 %v1331, %v1367
          %v1403 = vadd.f32 %v1332, %v1367
          %v1404 = vadd.f32 %v1333, %v1367
          %v1405 = vadd.f32 %v1334, %v1367
          %v1406 = vadd.f32 %v1335, %v1367
          %v1407 = vadd.f32 %v1336, %v1367
          %v1408 = vadd.f32 %v1337, %v1367
          %v1409 = vadd.f32 %v1338, %v1367
          %v1410 = vadd.f32 %v1339, %v1367
          %v1411 = vadd.f32 %v1340, %v1367
          %v1412 = vadd.f32 %v1341, %v1367
          %v1413 = vadd.f32 %v1342, %v1367
          %v1414 = vadd.f32 %v1343, %v1367
          %v1415 = vadd.f32 %v1344, %v1367
          %v1416 = vadd.f32 %v1345, %v1367
          %v1417 = vadd.f32 %v1346, %v1367
          %v1418 = vadd.f32 %v1347, %v1367
          %v1419 = vadd.f32 %v1348, %v1367
          %v1420 = vadd.f32 %v1349, %v1367
          %v1421 = vadd.f32 %v1350, %v1367
          %v1422 = vadd.f32 %v1351, %v1367
          %v1423 = vadd.f32 %v1352, %v1367
          %v1424 = vadd.f32 %v1353, %v1367
          %v1425 = vadd.f32 %v1354, %v1367
          %v1426 = vadd.f32 %v1355, %v1367
          %v1427 = vadd.f32 %v1356, %v1367
          %v1428 = vadd.f32 %v1357, %v1367
          %v1429 = vadd.f32 %v1358, %v1367
          %v1430 = vadd.f32 %v1359, %v1367
          %v1431 = vadd.f32 %v1360, %v1367
          %v1432 = vadd.f32 %v1361, %v1367
          %v1433 = vmax.f32 %v1369, 0.0
          %v1434 = vmax.f32 %v1370, 0.0
          %v1435 = vmax.f32 %v1371, 0.0
          %v1436 = vmax.f32 %v1372, 0.0
          %v1437 = vmax.f32 %v1373, 0.0
          %v1438 = vmax.f32 %v1374, 0.0
          %v1439 = vmax.f32 %v1375, 0.0
          %v1440 = vmax.f32 %v1376, 0.0
          %v1441 = vmax.f32 %v1377, 0.0
          %v1442 = vmax.f32 %v1378, 0.0
          %v1443 = vmax.f32 %v1379, 0.0
          %v1444 = vmax.f32 %v1380, 0.0
          %v1445 = vmax.f32 %v1381, 0.0
          %v1446 = vmax.f32 %v1382, 0.0
          %v1447 = vmax.f32 %v1383, 0.0
          %v1448 = vmax.f32 %v1384, 0.0
          %v1449 = vmax.f32 %v1385, 0.0
          %v1450 = vmax.f32 %v1386, 0.0
          %v1451 = vmax.f32 %v1387, 0.0
          %v1452 = vmax.f32 %v1388, 0.0
          %v1453 = vmax.f32 %v1389, 0.0
          %v1454 = vmax.f32 %v1390, 0.0
          %v1455 = vmax.f32 %v1391, 0.0
          %v1456 = vmax.f32 %v1392, 0.0
          %v1457 = vmax.f32 %v1393, 0.0
          %v1458 = vmax.f32 %v1394, 0.0
          %v1459 = vmax.f32 %v1395, 0.0
          %v1460 = vmax.f32 %v1396, 0.0
          %v1461 = vmax.f32 %v1397, 0.0
          %v1462 = vmax.f32 %v1398, 0.0
          %v1463 = vmax.f32 %v1399, 0.0
          %v1464 = vmax.f32 %v1400, 0.0
          %v1465 = vmax.f32 %v1401, 0.0
          %v1466 = vmax.f32 %v1402, 0.0
          %v1467 = vmax.f32 %v1403, 0.0
          %v1468 = vmax.f32 %v1404, 0.0
          %v1469 = vmax.f32 %v1405, 0.0
          %v1470 = vmax.f32 %v1406, 0.0
          %v1471 = vmax.f32 %v1407, 0.0
          %v1472 = vmax.f32 %v1408, 0.0
          %v1473 = vmax.f32 %v1409, 0.0
          %v1474 = vmax.f32 %v1410, 0.0
          %v1475 = vmax.f32 %v1411, 0.0
          %v1476 = vmax.f32 %v1412, 0.0
          %v1477 = vmax.f32 %v1413, 0.0
          %v1478 = vmax.f32 %v1414, 0.0
          %v1479 = vmax.f32 %v1415, 0.0
          %v1480 = vmax.f32 %v1416, 0.0
          %v1481 = vmax.f32 %v1417, 0.0
          %v1482 = vmax.f32 %v1418, 0.0
          %v1483 = vmax.f32 %v1419, 0.0
          %v1484 = vmax.f32 %v1420, 0.0
          %v1485 = vmax.f32 %v1421, 0.0
          %v1486 = vmax.f32 %v1422, 0.0
          %v1487 = vmax.f32 %v1423, 0.0
          %v1488 = vmax.f32 %v1424, 0.0
          %v1489 = vmax.f32 %v1425, 0.0
          %v1490 = vmax.f32 %v1426, 0.0
          %v1491 = vmax.f32 %v1427, 0.0
          %v1492 = vmax.f32 %v1428, 0.0
          %v1493 = vmax.f32 %v1429, 0.0
          %v1494 = vmax.f32 %v1430, 0.0
          %v1495 = vmax.f32 %v1431, 0.0
          %v1496 = vmax.f32 %v1432, 0.0
          %v1497 = vpack.c.bf16 %v1434, %v1433
          %v1498 = vpack.c.bf16 %v1436, %v1435
          %v1499 = vpack.c.bf16 %v1438, %v1437
          %v1500 = vpack.c.bf16 %v1440, %v1439
          %v1501 = vpack.c.bf16 %v1442, %v1441
          %v1502 = vpack.c.bf16 %v1444, %v1443
          %v1503 = vpack.c.bf16 %v1446, %v1445
          %v1504 = vpack.c.bf16 %v1448, %v1447
          %v1505 = vpack.c.bf16 %v1450, %v1449
          %v1506 = vpack.c.bf16 %v1452, %v1451
          %v1507 = vpack.c.bf16 %v1454, %v1453
          %v1508 = vpack.c.bf16 %v1456, %v1455
          %v1509 = vpack.c.bf16 %v1458, %v1457
          %v1510 = vpack.c.bf16 %v1460, %v1459
          %v1511 = vpack.c.bf16 %v1462, %v1461
          %v1512 = vpack.c.bf16 %v1464, %v1463
          %v1513 = vpack.c.bf16 %v1466, %v1465
          %v1514 = vpack.c.bf16 %v1468, %v1467
          %v1515 = vpack.c.bf16 %v1470, %v1469
          %v1516 = vpack.c.bf16 %v1472, %v1471
          %v1517 = vpack.c.bf16 %v1474, %v1473
          %v1518 = vpack.c.bf16 %v1476, %v1475
          %v1519 = vpack.c.bf16 %v1478, %v1477
          %v1520 = vpack.c.bf16 %v1480, %v1479
          %v1521 = vpack.c.bf16 %v1482, %v1481
          %v1522 = vpack.c.bf16 %v1484, %v1483
          %v1523 = vpack.c.bf16 %v1486, %v1485
          %v1524 = vpack.c.bf16 %v1488, %v1487
          %v1525 = vpack.c.bf16 %v1490, %v1489
          %v1526 = vpack.c.bf16 %v1492, %v1491
          %v1527 = vpack.c.bf16 %v1494, %v1493
          %v1528 = vpack.c.bf16 %v1496, %v1495
          %v1561 = vunpack.c.l.b16 %v1497
          %v1562 = vunpack.c.h.b16 %v1497
          %v1563 = vunpack.c.l.b16 %v1498
          %v1564 = vunpack.c.h.b16 %v1498
          %v1565 = vunpack.c.l.b16 %v1499
          %v1566 = vunpack.c.h.b16 %v1499
          %v1567 = vunpack.c.l.b16 %v1500
          %v1568 = vunpack.c.h.b16 %v1500
          %v1569 = vunpack.c.l.b16 %v1501
          %v1570 = vunpack.c.h.b16 %v1501
          %v1571 = vunpack.c.l.b16 %v1502
          %v1572 = vunpack.c.h.b16 %v1502
          %v1573 = vunpack.c.l.b16 %v1503
          %v1574 = vunpack.c.h.b16 %v1503
          %v1575 = vunpack.c.l.b16 %v1504
          %v1576 = vunpack.c.h.b16 %v1504
          %v1577 = vunpack.c.l.b16 %v1505
          %v1578 = vunpack.c.h.b16 %v1505
          %v1579 = vunpack.c.l.b16 %v1506
          %v1580 = vunpack.c.h.b16 %v1506
          %v1581 = vunpack.c.l.b16 %v1507
          %v1582 = vunpack.c.h.b16 %v1507
          %v1583 = vunpack.c.l.b16 %v1508
          %v1584 = vunpack.c.h.b16 %v1508
          %v1585 = vunpack.c.l.b16 %v1509
          %v1586 = vunpack.c.h.b16 %v1509
          %v1587 = vunpack.c.l.b16 %v1510
          %v1588 = vunpack.c.h.b16 %v1510
          %v1589 = vunpack.c.l.b16 %v1511
          %v1590 = vunpack.c.h.b16 %v1511
          %v1591 = vunpack.c.l.b16 %v1512
          %v1592 = vunpack.c.h.b16 %v1512
          %v1593 = vunpack.c.l.b16 %v1513
          %v1594 = vunpack.c.h.b16 %v1513
          %v1595 = vunpack.c.l.b16 %v1514
          %v1596 = vunpack.c.h.b16 %v1514
          %v1597 = vunpack.c.l.b16 %v1515
          %v1598 = vunpack.c.h.b16 %v1515
          %v1599 = vunpack.c.l.b16 %v1516
          %v1600 = vunpack.c.h.b16 %v1516
          %v1601 = vunpack.c.l.b16 %v1517
          %v1602 = vunpack.c.h.b16 %v1517
          %v1603 = vunpack.c.l.b16 %v1518
          %v1604 = vunpack.c.h.b16 %v1518
          %v1605 = vunpack.c.l.b16 %v1519
          %v1606 = vunpack.c.h.b16 %v1519
          %v1607 = vunpack.c.l.b16 %v1520
          %v1608 = vunpack.c.h.b16 %v1520
          %v1609 = vunpack.c.l.b16 %v1521
          %v1610 = vunpack.c.h.b16 %v1521
          %v1611 = vunpack.c.l.b16 %v1522
          %v1612 = vunpack.c.h.b16 %v1522
          %v1613 = vunpack.c.l.b16 %v1523
          %v1614 = vunpack.c.h.b16 %v1523
          %v1615 = vunpack.c.l.b16 %v1524
          %v1616 = vunpack.c.h.b16 %v1524
          %v1617 = vunpack.c.l.b16 %v1525
          %v1618 = vunpack.c.h.b16 %v1525
          %v1619 = vunpack.c.l.b16 %v1526
          %v1620 = vunpack.c.h.b16 %v1526
          %v1621 = vunpack.c.l.b16 %v1527
          %v1622 = vunpack.c.h.b16 %v1527
          %v1623 = vunpack.c.l.b16 %v1528
          %v1624 = vunpack.c.h.b16 %v1528
          %v1625 = vpack.c.b16 %v1561, %v1561
          %v1626 = vpack.c.b16 %v1562, %v1562
          %v1627 = vpack.c.b16 %v1563, %v1563
          %v1628 = vpack.c.b16 %v1564, %v1564
          %v1629 = vpack.c.b16 %v1565, %v1565
          %v1630 = vpack.c.b16 %v1566, %v1566
          %v1631 = vpack.c.b16 %v1567, %v1567
          %v1632 = vpack.c.b16 %v1568, %v1568
          %v1633 = vpack.c.b16 %v1569, %v1569
          %v1634 = vpack.c.b16 %v1570, %v1570
          %v1635 = vpack.c.b16 %v1571, %v1571
          %v1636 = vpack.c.b16 %v1572, %v1572
          %v1637 = vpack.c.b16 %v1573, %v1573
          %v1638 = vpack.c.b16 %v1574, %v1574
          %v1639 = vpack.c.b16 %v1575, %v1575
          %v1640 = vpack.c.b16 %v1576, %v1576
          %v1641 = vpack.c.b16 %v1577, %v1577
          %v1642 = vpack.c.b16 %v1578, %v1578
          %v1643 = vpack.c.b16 %v1579, %v1579
          %v1644 = vpack.c.b16 %v1580, %v1580
          %v1645 = vpack.c.b16 %v1581, %v1581
          %v1646 = vpack.c.b16 %v1582, %v1582
          %v1647 = vpack.c.b16 %v1583, %v1583
          %v1648 = vpack.c.b16 %v1584, %v1584
          %v1649 = vpack.c.b16 %v1585, %v1585
          %v1650 = vpack.c.b16 %v1586, %v1586
          %v1651 = vpack.c.b16 %v1587, %v1587
          %v1652 = vpack.c.b16 %v1588, %v1588
          %v1653 = vpack.c.b16 %v1589, %v1589
          %v1654 = vpack.c.b16 %v1590, %v1590
          %v1655 = vpack.c.b16 %v1591, %v1591
          %v1656 = vpack.c.b16 %v1592, %v1592
          %v1657 = vpack.c.b16 %v1593, %v1593
          %v1658 = vpack.c.b16 %v1594, %v1594
          %v1659 = vpack.c.b16 %v1595, %v1595
          %v1660 = vpack.c.b16 %v1596, %v1596
          %v1661 = vpack.c.b16 %v1597, %v1597
          %v1662 = vpack.c.b16 %v1598, %v1598
          %v1663 = vpack.c.b16 %v1599, %v1599
          %v1664 = vpack.c.b16 %v1600, %v1600
          %v1665 = vpack.c.b16 %v1601, %v1601
          %v1666 = vpack.c.b16 %v1602, %v1602
          %v1667 = vpack.c.b16 %v1603, %v1603
          %v1668 = vpack.c.b16 %v1604, %v1604
          %v1669 = vpack.c.b16 %v1605, %v1605
          %v1670 = vpack.c.b16 %v1606, %v1606
          %v1671 = vpack.c.b16 %v1607, %v1607
          %v1672 = vpack.c.b16 %v1608, %v1608
          %v1673 = vpack.c.b16 %v1609, %v1609
          %v1674 = vpack.c.b16 %v1610, %v1610
          %v1675 = vpack.c.b16 %v1611, %v1611
          %v1676 = vpack.c.b16 %v1612, %v1612
          %v1677 = vpack.c.b16 %v1613, %v1613
          %v1678 = vpack.c.b16 %v1614, %v1614
          %v1679 = vpack.c.b16 %v1615, %v1615
          %v1680 = vpack.c.b16 %v1616, %v1616
          %v1681 = vpack.c.b16 %v1617, %v1617
          %v1682 = vpack.c.b16 %v1618, %v1618
          %v1683 = vpack.c.b16 %v1619, %v1619
          %v1684 = vpack.c.b16 %v1620, %v1620
          %v1685 = vpack.c.b16 %v1621, %v1621
          %v1686 = vpack.c.b16 %v1622, %v1622
          %v1687 = vpack.c.b16 %v1623, %v1623
          %v1688 = vpack.c.b16 %v1624, %v1624
          %1753 = vst [vmem:[%s228] sm:$0xf] %v1625
          %1754 = vst [vmem:[%s228 + $0x4] sm:$0xf] %v1626
          %1755 = vst [vmem:[%s228 + $0x8] sm:$0xf] %v1627
          %1756 = vst [vmem:[%s228 + $0xc] sm:$0xf] %v1628
          %1757 = vst [vmem:[%s228 + $0x10] sm:$0xf] %v1629
          %1758 = vst [vmem:[%s228 + $0x14] sm:$0xf] %v1630
          %1759 = vst [vmem:[%s228 + $0x18] sm:$0xf] %v1631
          %1760 = vst [vmem:[%s228 + $0x1c] sm:$0xf] %v1632
          %1761 = vst [vmem:[%s228 + $0x20] sm:$0xf] %v1633
          %1762 = vst [vmem:[%s228 + $0x24] sm:$0xf] %v1634
          %1763 = vst [vmem:[%s228 + $0x28] sm:$0xf] %v1635
          %1764 = vst [vmem:[%s228 + $0x2c] sm:$0xf] %v1636
          %1765 = vst [vmem:[%s228 + $0x30] sm:$0xf] %v1637
          %1766 = vst [vmem:[%s228 + $0x34] sm:$0xf] %v1638
          %1767 = vst [vmem:[%s228 + $0x38] sm:$0xf] %v1639
          %1768 = vst [vmem:[%s228 + $0x3c] sm:$0xf] %v1640
          %1769 = vst [vmem:[%s228 + $0x40] sm:$0xf] %v1641
          %1770 = vst [vmem:[%s228 + $0x44] sm:$0xf] %v1642
          %1771 = vst [vmem:[%s228 + $0x48] sm:$0xf] %v1643
          %1772 = vst [vmem:[%s228 + $0x4c] sm:$0xf] %v1644
          %1773 = vst [vmem:[%s228 + $0x50] sm:$0xf] %v1645
          %1774 = vst [vmem:[%s228 + $0x54] sm:$0xf] %v1646
          %1775 = vst [vmem:[%s228 + $0x58] sm:$0xf] %v1647
          %1776 = vst [vmem:[%s228 + $0x5c] sm:$0xf] %v1648
          %1777 = vst [vmem:[%s228 + $0x60] sm:$0xf] %v1649
          %1778 = vst [vmem:[%s228 + $0x64] sm:$0xf] %v1650
          %1779 = vst [vmem:[%s228 + $0x68] sm:$0xf] %v1651
          %1780 = vst [vmem:[%s228 + $0x6c] sm:$0xf] %v1652
          %1781 = vst [vmem:[%s228 + $0x70] sm:$0xf] %v1653
          %1782 = vst [vmem:[%s228 + $0x74] sm:$0xf] %v1654
          %1783 = vst [vmem:[%s228 + $0x78] sm:$0xf] %v1655
          %1784 = vst [vmem:[%s228 + $0x7c] sm:$0xf] %v1656
          %1785 = vst [vmem:[%s228 + $0x80] sm:$0xf] %v1657
          %1786 = vst [vmem:[%s228 + $0x84] sm:$0xf] %v1658
          %1787 = vst [vmem:[%s228 + $0x88] sm:$0xf] %v1659
          %1788 = vst [vmem:[%s228 + $0x8c] sm:$0xf] %v1660
          %1789 = vst [vmem:[%s228 + $0x90] sm:$0xf] %v1661
          %1790 = vst [vmem:[%s228 + $0x94] sm:$0xf] %v1662
          %1791 = vst [vmem:[%s228 + $0x98] sm:$0xf] %v1663
          %1792 = vst [vmem:[%s228 + $0x9c] sm:$0xf] %v1664
          %1793 = vst [vmem:[%s228 + $0xa0] sm:$0xf] %v1665
          %1794 = vst [vmem:[%s228 + $0xa4] sm:$0xf] %v1666
          %1795 = vst [vmem:[%s228 + $0xa8] sm:$0xf] %v1667
          %1796 = vst [vmem:[%s228 + $0xac] sm:$0xf] %v1668
          %1797 = vst [vmem:[%s228 + $0xb0] sm:$0xf] %v1669
          %1798 = vst [vmem:[%s228 + $0xb4] sm:$0xf] %v1670
          %1799 = vst [vmem:[%s228 + $0xb8] sm:$0xf] %v1671
          %1800 = vst [vmem:[%s228 + $0xbc] sm:$0xf] %v1672
          %1801 = vst [vmem:[%s228 + $0xc0] sm:$0xf] %v1673
          %1802 = vst [vmem:[%s228 + $0xc4] sm:$0xf] %v1674
          %1803 = vst [vmem:[%s228 + $0xc8] sm:$0xf] %v1675
          %1804 = vst [vmem:[%s228 + $0xcc] sm:$0xf] %v1676
          %1805 = vst [vmem:[%s228 + $0xd0] sm:$0xf] %v1677
          %1806 = vst [vmem:[%s228 + $0xd4] sm:$0xf] %v1678
          %1807 = vst [vmem:[%s228 + $0xd8] sm:$0xf] %v1679
          %1808 = vst [vmem:[%s228 + $0xdc] sm:$0xf] %v1680
          %1809 = vst [vmem:[%s228 + $0xe0] sm:$0xf] %v1681
          %1810 = vst [vmem:[%s228 + $0xe4] sm:$0xf] %v1682
          %1811 = vst [vmem:[%s228 + $0xe8] sm:$0xf] %v1683
          %1812 = vst [vmem:[%s228 + $0xec] sm:$0xf] %v1684
          %1813 = vst [vmem:[%s228 + $0xf0] sm:$0xf] %v1685
          %1814 = vst [vmem:[%s228 + $0xf4] sm:$0xf] %v1686
          %1815 = vst [vmem:[%s228 + $0xf8] sm:$0xf] %v1687
          %1816 = vst [vmem:[%s228 + $0xfc] sm:$0xf] %v1688
        $region48: #{tpu_custom_call.1} parent=31 // pred_fallthru
          _
        %s1817 = sand.u32 %s116, 1
        %s1818 = scalar_lea.sflag [#allocation5], %s1817
        %s1819 = sand.u32 %s116, 1
        %s1820 = smul.addr %s1819, 256
        %s1821 = scalar_lea.vmem [#allocation8], %s1820
        // Predicated region
        $region49: #{tpu_custom_call.1} parent=31 // pred_check
          %p1822 = pneg %p126
        $region50: #{tpu_custom_call.1} parent=31 // pred_check_branch
          %1824 = sbr.rel (%p1822) target = $region52
        $region51: #{tpu_custom_call.1} parent=31 // pred_region
          %s1825 = smul.u32 64, %s25
          %s1827 = ssub.s32 4096, 4096
          %1828 = vsyncadd %s1818, %s1827
          %s1829 = smul.addr %s1825, 64
          %s1830 = scalar_lea.hbm %s3, %s1829
          %s1831 = sshll.u32 %s1821, 4
          %s1832 = int_to_ptr.vmem [resolvable:$true] %s1831
          %1837 = dma.vmem_to_hbm [thread:$0]  %s1832, 4096, %s1830, %s1818, 64, 64, 4
        $region52: #{tpu_custom_call.1} parent=31 // pred_fallthru
          _
      $region32: #{tpu_custom_call.1} parent=5 // pred_fallthru
        _
      %p1838 = scmp.le.s32.totalorder 2, %s16
      // Predicated region
      $region53: #{tpu_custom_call.1} parent=5 // pred_check
        %p1839 = pneg %p1838
      $region54: #{tpu_custom_call.1} parent=5 // pred_check_branch
        %1841 = sbr.rel (%p1839) target = $region56
      $region55: #{tpu_custom_call.1} parent=5 // pred_region
        %s1842 = ssub.s32 %s16, 2
        // Predicated region
        $region57: #{tpu_custom_call.1} parent=55 // pred_check
          %p1843 = pneg %p132
        $region58: #{tpu_custom_call.1} parent=55 // pred_check_branch
          %1845 = sbr.rel (%p1843) target = $region60
        $region59: #{tpu_custom_call.1} parent=55 // pred_region
          %s1846 = sand.u32 %s117, 1
          %s1847 = scalar_lea.sflag [#allocation5], %s1846
          %s1848 = sand.u32 %s117, 1
          %s1849 = smul.addr %s1848, 256
          %s1850 = scalar_lea.vmem [#allocation8], %s1849
          %1851 = dma.done %s1847, 4096
        $region60: #{tpu_custom_call.1} parent=55 // pred_fallthru
          _
      $region56: #{tpu_custom_call.1} parent=5 // pred_fallthru
        _
    $region6: #{tpu_custom_call.1} parent=1 // loop_footer
      %s20 = sadd.s32 1, %s16
    $region7: #{tpu_custom_call.1} parent=1 // loop_footer_branch
      %15 = sbr.rel target = $region3
    $region8: #{tpu_custom_call.1} parent=1 // loop_exit
      _
    %1852 = vsyncpa [#allocation4], 1
    %s1853 = scalar_lea.sflag [#allocation4], 1
    %1854 = vsyncpa %s1853, 1
    %1855 = vsyncpa [#allocation7], 1
    %1856 = vsyncpa [#allocation5], 1
    %s1857 = scalar_lea.sflag [#allocation5], 1
    %1858 = vsyncpa %s1857, 1

</llo_original>
